<compile_context>
chip_gen: v6e
topology: v6e:2x2x1
jax: 0.10.0
libtpu: 0.0.40
codegen_flags: <defaults>
</compile_context>

<pallas_src>
import jax
import jax.numpy as jnp
from jax import lax
from jax.experimental import pallas as pl
from jax.experimental.pallas import tpu as pltpu

# ----------------------------- small "roberta-like" config -------------------
VOCAB = 100
HIDDEN = 32
N_LAYERS = 2
N_HEADS = 4
HEAD_DIM = HIDDEN // N_HEADS
INTERMEDIATE = 64
MAX_POS = 40
NUM_LABELS = 5
PAD_ID = 1            # roberta padding_idx
LN_EPS = 1e-5
LOGITS_PAD = 128      # lane-dense width for the classifier output tile
NEG_INF = -1e9
_INV_SQRT2 = 0.7071067811865476

# packed-slab geometry
W_ROWS = 3 * HIDDEN   # 96  rows of the per-layer bf16 weight slab
W_LANES = 4 * HIDDEN  # 128 lanes: wqkv | wo | wi | wf^T blocks
V_ROWS = 8            # rows of the per-layer f32 bias/LN slab


# ----------------------------- in-kernel helpers ------------------------------
def _ln(x, g, b):
    mean = jnp.mean(x, axis=-1, keepdims=True)
    var = jnp.mean(jnp.square(x - mean), axis=-1, keepdims=True)
    return (x - mean) * lax.rsqrt(var + LN_EPS) * g + b


def _mm_nt(x, w):
    """x: [M, K] (f32) times w^T, w: [N, K] (already bf16) -> f32 [M, N]."""
    return lax.dot_general(x.astype(jnp.bfloat16), w.astype(jnp.bfloat16),
                           dimension_numbers=(((1,), (1,)), ((), ())),
                           preferred_element_type=jnp.float32)


def _mm(x, w):
    """x: [M, K] (f32) times w, w: [K, N] -> f32 [M, N]."""
    return lax.dot_general(x.astype(jnp.bfloat16), w.astype(jnp.bfloat16),
                           dimension_numbers=(((1,), (0,)), ((), ())),
                           preferred_element_type=jnp.float32)


# ----------------------------- fused forward kernel ---------------------------
def _fused_forward_kernel(emb_ref, mask_ref, gvec_ref, w_ref, vec_ref,
                          cls_ref, out_ref):
    """Whole classifier forward for ONE batch element (grid=(B,)).

    emb_ref : [S, H]        f32   embedding sums (pre-LN)
    mask_ref: [NH*S, NH*S]  f32   additive mask (block-diag keep + key pad)
    gvec_ref: [4, 128]      f32   emb_ln_g | emb_ln_b | cls_b1 | cls_b2(pad)
    w_ref   : [L, 96, 128]  bf16  wqkv | wo | wi | wf^T lane blocks
    vec_ref : [L, 8, 128]   f32   per-layer bias / LN vectors
    cls_ref : [128, 128]    bf16  cls out_proj (padded) | cls dense
    out_ref : [1, 128]      f32   padded logits
    """
    H, I, D, NH = HIDDEN, INTERMEDIATE, HEAD_DIM, N_HEADS
    gv = gvec_ref[...]
    x = _ln(emb_ref[...], gv[0:1, :H], gv[1:2, :H])              # [S, H]
    S = x.shape[0]
    mask = mask_ref[...]                                         # [NH*S, NH*S]
    scale = jnp.float32(1.0 / (D ** 0.5))

    for l in range(N_LAYERS):                                    # static unroll
        w = w_ref[l]                                             # [96, 128] bf16
        vec = vec_ref[l]                                         # [8, 128]  f32
        wqkv = w[:, 0:H]                                         # [3H, H]
        wo = w[0:H, H:2 * H]                                     # [H, H]
        wi = w[0:I, 2 * H:3 * H]                                 # [I, H]
        wf_t = w[0:I, 3 * H:4 * H]                               # [I, H] (= wf^T)
        bqkv = vec[0:1, 0:3 * H]
        bo = vec[1:2, 0:H]
        g1, b1 = vec[2:3, 0:H], vec[3:4, 0:H]
        bi = vec[4:5, 0:I]
        bf = vec[5:6, 0:H]
        g2, b2 = vec[6:7, 0:H], vec[7:8, 0:H]

        # ---- fused QKV projection: one MXU push ----
        qkv = _mm_nt(x, wqkv) + bqkv                             # [S, 3H]

        # ---- attention: heads stacked along sublanes -> 2 MXU pushes ----
        q_all = jnp.concatenate(
            [qkv[:, h * D:(h + 1) * D] for h in range(NH)], axis=0)          # [NH*S, D]
        k_all = jnp.concatenate(
            [qkv[:, H + h * D:H + (h + 1) * D] for h in range(NH)], axis=0)
        v_all = jnp.concatenate(
            [qkv[:, 2 * H + h * D:2 * H + (h + 1) * D] for h in range(NH)], axis=0)
        s = _mm_nt(q_all, k_all) * scale + mask                  # [NH*S, NH*S]
        s = s - jnp.max(s, axis=-1, keepdims=True)
        p = jnp.exp(s)                   # cross-head / padded-key cols -> exactly 0
        p = p / jnp.sum(p, axis=-1, keepdims=True)               # exact divide
        ctx_all = _mm(p, v_all)                                  # [NH*S, D]
        # merge heads back into lane blocks, single W_o projection
        ctx = jnp.concatenate(
            [ctx_all[h * S:(h + 1) * S, :] for h in range(NH)], axis=-1)     # [S, H]
        attn = _mm_nt(ctx, wo) + bo
        x1 = _ln(attn + x, g1, b1)                               # add + LN

        # ---- FFN: up-proj + exact (erf) GELU, down-proj, add + LN ----
        inter = _mm_nt(x1, wi) + bi                              # [S, I]
        inter = 0.5 * inter * (1.0 + lax.erf(inter * jnp.float32(_INV_SQRT2)))
        ffn = _mm(inter, wf_t) + bf                              # [S, H]
        x = _ln(ffn + x1, g2, b2)

    # ---- RobertaClassificationHead on the <s> token: dense -> tanh -> out_proj
    cls_tok = x[0:1, :]                                          # [1, H]
    w1 = cls_ref[0:H, H:2 * H]                                   # [H, H]
    w2 = cls_ref[:, 0:H]                                         # [128, H]
    y = jnp.tanh(_mm_nt(cls_tok, w1) + gv[2:3, :H])
    out_ref[...] = _mm_nt(y, w2) + gv[3:4, :]                    # [1, 128]


def fused_forward(emb, big_mask, packed):
    B, S, H = emb.shape
    NS = N_HEADS * S
    return pl.pallas_call(
        _fused_forward_kernel,
        out_shape=jax.ShapeDtypeStruct((B, 1, LOGITS_PAD), jnp.float32),
        grid=(B,),
        in_specs=[
            pl.BlockSpec((None, S, H), lambda b: (b, 0, 0)),               # emb
            pl.BlockSpec((None, NS, NS), lambda b: (b, 0, 0)),             # mask
            pl.BlockSpec((4, 128), lambda b: (0, 0)),                      # gvec
            pl.BlockSpec((N_LAYERS, W_ROWS, W_LANES), lambda b: (0, 0, 0)),  # weight slab
            pl.BlockSpec((N_LAYERS, V_ROWS, 128), lambda b: (0, 0, 0)),      # bias/LN slab
            pl.BlockSpec((LOGITS_PAD, 128), lambda b: (0, 0)),             # cls slab
        ],
        out_specs=pl.BlockSpec((None, 1, LOGITS_PAD), lambda b: (b, 0, 0)),
        compiler_params=pltpu.CompilerParams(
            dimension_semantics=("parallel",)),
    )(emb, big_mask, packed["gvec"], packed["w_slab"], packed["vec_slab"],
      packed["cls_slab"])


# ----------------------------- parameters & packing ---------------------------
def init_params(key):
    keys = iter(jax.random.split(key, 64))

    def nrm(shape):
        return 0.02 * jax.random.normal(next(keys), shape, jnp.float32)

    params = {
        "word_emb": nrm((VOCAB, HIDDEN)),
        "pos_emb": nrm((MAX_POS, HIDDEN)),
        "type_emb": nrm((1, HIDDEN)),
        "emb_ln_g": 1.0 + nrm((HIDDEN,)),
        "emb_ln_b": nrm((HIDDEN,)),
        "layers": [],
        "cls_dense_w": nrm((HIDDEN, HIDDEN)),
        "cls_dense_b": nrm((HIDDEN,)),
        "cls_out_w": nrm((NUM_LABELS, HIDDEN)),
        "cls_out_b": nrm((NUM_LABELS,)),
    }
    for _ in range(N_LAYERS):
        params["layers"].append({
            # fused [q; k; v] projection — mathematically identical to 3 Linears
            "wqkv": nrm((3 * HIDDEN, HIDDEN)), "bqkv": nrm((3 * HIDDEN,)),
            "wo": nrm((HIDDEN, HIDDEN)), "bo": nrm((HIDDEN,)),
            "ln1_g": 1.0 + nrm((HIDDEN,)), "ln1_b": nrm((HIDDEN,)),
            "wi": nrm((INTERMEDIATE, HIDDEN)), "bi": nrm((INTERMEDIATE,)),
            "wf": nrm((HIDDEN, INTERMEDIATE)), "bf": nrm((HIDDEN,)),
            "ln2_g": 1.0 + nrm((HIDDEN,)), "ln2_b": nrm((HIDDEN,)),
        })
    return params


def pack_params(params):
    """One-time packing (outside jit): bf16 weight slab + f32 vector slabs."""
    H, I = HIDDEN, INTERMEDIATE
    w_slab = jnp.zeros((N_LAYERS, W_ROWS, W_LANES), jnp.bfloat16)
    vec_slab = jnp.zeros((N_LAYERS, V_ROWS, 128), jnp.float32)
    for l, lp in enumerate(params["layers"]):
        w_slab = w_slab.at[l, 0:3 * H, 0:H].set(lp["wqkv"].astype(jnp.bfloat16))
        w_slab = w_slab.at[l, 0:H, H:2 * H].set(lp["wo"].astype(jnp.bfloat16))
        w_slab = w_slab.at[l, 0:I, 2 * H:3 * H].set(lp["wi"].astype(jnp.bfloat16))
        w_slab = w_slab.at[l, 0:I, 3 * H:4 * H].set(lp["wf"].T.astype(jnp.bfloat16))
        vec_slab = vec_slab.at[l, 0, 0:3 * H].set(lp["bqkv"])
        vec_slab = vec_slab.at[l, 1, 0:H].set(lp["bo"])
        vec_slab = vec_slab.at[l, 2, 0:H].set(lp["ln1_g"])
        vec_slab = vec_slab.at[l, 3, 0:H].set(lp["ln1_b"])
        vec_slab = vec_slab.at[l, 4, 0:I].set(lp["bi"])
        vec_slab = vec_slab.at[l, 5, 0:H].set(lp["bf"])
        vec_slab = vec_slab.at[l, 6, 0:H].set(lp["ln2_g"])
        vec_slab = vec_slab.at[l, 7, 0:H].set(lp["ln2_b"])

    gvec = jnp.zeros((4, 128), jnp.float32)
    gvec = gvec.at[0, 0:H].set(params["emb_ln_g"])
    gvec = gvec.at[1, 0:H].set(params["emb_ln_b"])
    gvec = gvec.at[2, 0:H].set(params["cls_dense_b"])
    gvec = gvec.at[3, 0:NUM_LABELS].set(params["cls_out_b"])

    cls_slab = jnp.zeros((LOGITS_PAD, 128), jnp.bfloat16)
    cls_slab = cls_slab.at[0:NUM_LABELS, 0:H].set(
        params["cls_out_w"].astype(jnp.bfloat16))
    cls_slab = cls_slab.at[0:H, H:2 * H].set(
        params["cls_dense_w"].astype(jnp.bfloat16))

    return {
        "word_emb": params["word_emb"],
        "pos_emb": params["pos_emb"],
        "type_emb": params["type_emb"],
        "w_slab": w_slab,
        "vec_slab": vec_slab,
        "gvec": gvec,
        "cls_slab": cls_slab,
    }


# ----------------------------- forward pass -----------------------------------
@jax.jit
def transformer_multi_classifier(packed, input_ids, attention_mask):
    """Returns classification logits [B, NUM_LABELS] (the `.logits` of HF output)."""
    B, S = input_ids.shape

    # roberta embeddings: word + position (cumsum over non-pad) + token-type(0)
    not_pad = (input_ids != PAD_ID).astype(jnp.int32)
    position_ids = jnp.cumsum(not_pad, axis=1) * not_pad + PAD_ID
    emb = (jnp.take(packed["word_emb"], input_ids, axis=0)
           + jnp.take(packed["pos_emb"], position_ids, axis=0)
           + packed["type_emb"][0])                               # [B, S, H]
    # (dropout is a no-op in eval mode)

    # combined additive mask for the head-stacked score matrix:
    # cross-head blocks and padded-key columns get NEG_INF.
    key_add = (1.0 - attention_mask.astype(jnp.float32)) * NEG_INF   # [B, S]
    key_add = jnp.tile(key_add, (1, N_HEADS))                        # [B, NH*S]
    head_id = jnp.arange(N_HEADS * S, dtype=jnp.int32) // S
    block = jnp.where(head_id[:, None] == head_id[None, :],
                      0.0, NEG_INF).astype(jnp.float32)              # [NH*S, NH*S]
    big_mask = block[None, :, :] + key_add[:, None, :]               # [B, NH*S, NH*S]

    logits_pad = fused_forward(emb, big_mask, packed)                # [B, 1, 128]
    return logits_pad[:, 0, :NUM_LABELS]
    # TODO(synk): loss computation (when labels are passed to the HF model) is
    # not implemented; only logits are produced, matching the label-free call.


# ----------------------------- pure-JAX f32 reference --------------------------
def reference_forward(params, input_ids, attention_mask):
    B, S = input_ids.shape
    H, D, NH = HIDDEN, HEAD_DIM, N_HEADS

    def ln(v, g, b):
        m = v.mean(-1, keepdims=True)
        var = ((v - m) ** 2).mean(-1, keepdims=True)
        return (v - m) / jnp.sqrt(var + LN_EPS) * g + b

    not_pad = (input_ids != PAD_ID).astype(jnp.int32)
    position_ids = jnp.cumsum(not_pad, axis=1) * not_pad + PAD_ID
    x = (params["word_emb"][input_ids] + params["pos_emb"][position_ids]
         + params["type_emb"][0])
    x = ln(x, params["emb_ln_g"], params["emb_ln_b"])
    add_mask = (1.0 - attention_mask.astype(jnp.float32))[:, None, None, :] * NEG_INF

    for lp in params["layers"]:
        qkv = x @ lp["wqkv"].T + lp["bqkv"]
        q, k, v = jnp.split(qkv, 3, axis=-1)
        q = q.reshape(B, S, NH, D).transpose(0, 2, 1, 3)
        k = k.reshape(B, S, NH, D).transpose(0, 2, 1, 3)
        v = v.reshape(B, S, NH, D).transpose(0, 2, 1, 3)
        s = q @ k.transpose(0, 1, 3, 2) * (1.0 / D ** 0.5) + add_mask
        p = jax.nn.softmax(s, axis=-1)
        ctx = (p @ v).transpose(0, 2, 1, 3).reshape(B, S, H)
        x1 = ln(ctx @ lp["wo"].T + lp["bo"] + x, lp["ln1_g"], lp["ln1_b"])
        inter = x1 @ lp["wi"].T + lp["bi"]
        inter = 0.5 * inter * (1.0 + lax.erf(inter * _INV_SQRT2))
        x = ln(inter @ lp["wf"].T + lp["bf"] + x1, lp["ln2_g"], lp["ln2_b"])

    cls_tok = x[:, 0, :]
    y = jnp.tanh(cls_tok @ params["cls_dense_w"].T + params["cls_dense_b"])
    return y @ params["cls_out_w"].T + params["cls_out_b"]


# ----------------------------- demo --------------------------------------------
if __name__ == "__main__":
    B, S = 2, 8
    key = jax.random.PRNGKey(0)
    k_ids, k_params = jax.random.split(key)

    input_ids = jax.random.randint(k_ids, (B, S), 2, VOCAB, dtype=jnp.int32)
    input_ids = input_ids.at[1, -2:].set(PAD_ID)        # pad tail of 2nd sequence
    attention_mask = (input_ids != PAD_ID).astype(jnp.int32)

    params = init_params(k_params)
    packed = pack_params(params)                        # packing hoisted out of jit

    logits = transformer_multi_classifier(packed, input_ids, attention_mask)
    jax.block_until_ready(logits)

    assert logits.shape == (B, NUM_LABELS)
    assert bool(jnp.all(jnp.isfinite(logits)))
    ref = reference_forward(params, input_ids, attention_mask)
    assert bool(jnp.allclose(logits, ref, atol=3e-3)), (
        "max abs diff vs f32 reference: "
        f"{float(jnp.max(jnp.abs(logits - ref)))}")
    print("KERNEL_OK")
</pallas_src>

<mosaic_0001>
module attributes {stable_mosaic.version = 11 : i64} {
  func.func @_fused_forward_kernel(%arg0: i32, %arg1: memref<1x8x32xf32, #tpu.memory_space<vmem>>, %arg2: memref<1x32x32xf32, #tpu.memory_space<vmem>>, %arg3: memref<4x128xf32, #tpu.memory_space<vmem>>, %arg4: memref<2x96x128xbf16, #tpu.memory_space<vmem>>, %arg5: memref<2x8x128xf32, #tpu.memory_space<vmem>>, %arg6: memref<128x128xbf16, #tpu.memory_space<vmem>>, %arg7: memref<1x1x128xf32, #tpu.memory_space<vmem>>) attributes {dimension_semantics = [#tpu.dimension_semantics<parallel>], iteration_bounds = array<i64: 2>, scalar_prefetch = 0 : i64, scratch_operands = 0 : i64, tpu.core_type = #tpu.core_type<tc>, window_params = [{transform_indices = @transform_0, window_bounds = array<i64: 1, 8, 32>}, {transform_indices = @transform_1, window_bounds = array<i64: 1, 32, 32>}, {pipeline_mode = #tpu.pipeline_mode<synchronous>, transform_indices = @transform_2, window_bounds = array<i64: 4, 128>}, {pipeline_mode = #tpu.pipeline_mode<synchronous>, transform_indices = @transform_3, window_bounds = array<i64: 2, 96, 128>}, {pipeline_mode = #tpu.pipeline_mode<synchronous>, transform_indices = @transform_4, window_bounds = array<i64: 2, 8, 128>}, {pipeline_mode = #tpu.pipeline_mode<synchronous>, transform_indices = @transform_5, window_bounds = array<i64: 128, 128>}, {transform_indices = @transform_6, window_bounds = array<i64: 1, 1, 128>}]} {
    %c0 = arith.constant 0 : index
    %c0_0 = arith.constant 0 : index
    %0 = vector.load %arg3[%c0, %c0_0] : memref<4x128xf32, #tpu.memory_space<vmem>>, vector<4x128xf32>
    %c0_1 = arith.constant 0 : index
    %c0_2 = arith.constant 0 : index
    %c0_3 = arith.constant 0 : index
    %1 = vector.load %arg1[%c0_1, %c0_2, %c0_3] : memref<1x8x32xf32, #tpu.memory_space<vmem>>, vector<1x8x32xf32>
    %2 = vector.shape_cast %1 : vector<1x8x32xf32> to vector<8x32xf32>
    %3 = vector.extract_strided_slice %0 {offsets = [0, 0], sizes = [1, 32], strides = [1, 1]} : vector<4x128xf32> to vector<1x32xf32>
    %4 = vector.extract_strided_slice %0 {offsets = [1, 0], sizes = [1, 32], strides = [1, 1]} : vector<4x128xf32> to vector<1x32xf32>
    %cst = arith.constant dense<0.000000e+00> : vector<8xf32>
    %5 = vector.multi_reduction <add>, %2, %cst [1] : vector<8x32xf32> to vector<8xf32>
    %6 = vector.shape_cast %5 : vector<8xf32> to vector<8x1xf32>
    %cst_4 = arith.constant 3.200000e+01 : f32
    %7 = vector.broadcast %cst_4 : f32 to vector<8x1xf32>
    %8 = arith.divf %6, %7 : vector<8x1xf32>
    %9 = vector.broadcast %8 : vector<8x1xf32> to vector<8x32xf32>
    %10 = arith.subf %2, %9 : vector<8x32xf32>
    %11 = arith.mulf %10, %10 : vector<8x32xf32>
    %cst_5 = arith.constant dense<0.000000e+00> : vector<8xf32>
    %12 = vector.multi_reduction <add>, %11, %cst_5 [1] : vector<8x32xf32> to vector<8xf32>
    %13 = vector.shape_cast %12 : vector<8xf32> to vector<8x1xf32>
    %cst_6 = arith.constant 3.200000e+01 : f32
    %14 = vector.broadcast %cst_6 : f32 to vector<8x1xf32>
    %15 = arith.divf %13, %14 : vector<8x1xf32>
    %16 = vector.broadcast %8 : vector<8x1xf32> to vector<8x32xf32>
    %17 = arith.subf %2, %16 : vector<8x32xf32>
    %cst_7 = arith.constant 9.99999974E-6 : f32
    %18 = vector.broadcast %cst_7 : f32 to vector<8x1xf32>
    %19 = arith.addf %15, %18 : vector<8x1xf32>
    %20 = math.rsqrt %19 : vector<8x1xf32>
    %21 = vector.broadcast %20 : vector<8x1xf32> to vector<8x32xf32>
    %22 = arith.mulf %17, %21 : vector<8x32xf32>
    %23 = vector.broadcast %3 : vector<1x32xf32> to vector<8x32xf32>
    %24 = arith.mulf %22, %23 : vector<8x32xf32>
    %25 = vector.broadcast %4 : vector<1x32xf32> to vector<8x32xf32>
    %26 = arith.addf %24, %25 : vector<8x32xf32>
    %c0_8 = arith.constant 0 : index
    %c0_9 = arith.constant 0 : index
    %c0_10 = arith.constant 0 : index
    %27 = vector.load %arg2[%c0_8, %c0_9, %c0_10] : memref<1x32x32xf32, #tpu.memory_space<vmem>>, vector<1x32x32xf32>
    %28 = vector.shape_cast %27 : vector<1x32x32xf32> to vector<32x32xf32>
    %c0_11 = arith.constant 0 : index
    %c0_12 = arith.constant 0 : index
    %c0_13 = arith.constant 0 : index
    %29 = vector.load %arg4[%c0_11, %c0_12, %c0_13] : memref<2x96x128xbf16, #tpu.memory_space<vmem>>, vector<1x96x128xbf16>
    %30 = vector.shape_cast %29 : vector<1x96x128xbf16> to vector<96x128xbf16>
    %c0_14 = arith.constant 0 : index
    %c0_15 = arith.constant 0 : index
    %c0_16 = arith.constant 0 : index
    %31 = vector.load %arg5[%c0_14, %c0_15, %c0_16] : memref<2x8x128xf32, #tpu.memory_space<vmem>>, vector<1x8x128xf32>
    %32 = vector.shape_cast %31 : vector<1x8x128xf32> to vector<8x128xf32>
    %33 = vector.extract_strided_slice %30 {offsets = [0, 0], sizes = [96, 32], strides = [1, 1]} : vector<96x128xbf16> to vector<96x32xbf16>
    %34 = vector.extract_strided_slice %30 {offsets = [0, 32], sizes = [32, 32], strides = [1, 1]} : vector<96x128xbf16> to vector<32x32xbf16>
    %35 = vector.extract_strided_slice %30 {offsets = [0, 64], sizes = [64, 32], strides = [1, 1]} : vector<96x128xbf16> to vector<64x32xbf16>
    %36 = vector.extract_strided_slice %30 {offsets = [0, 96], sizes = [64, 32], strides = [1, 1]} : vector<96x128xbf16> to vector<64x32xbf16>
    %37 = vector.extract_strided_slice %32 {offsets = [0, 0], sizes = [1, 96], strides = [1, 1]} : vector<8x128xf32> to vector<1x96xf32>
    %38 = vector.extract_strided_slice %32 {offsets = [1, 0], sizes = [1, 32], strides = [1, 1]} : vector<8x128xf32> to vector<1x32xf32>
    %39 = vector.extract_strided_slice %32 {offsets = [2, 0], sizes = [1, 32], strides = [1, 1]} : vector<8x128xf32> to vector<1x32xf32>
    %40 = vector.extract_strided_slice %32 {offsets = [3, 0], sizes = [1, 32], strides = [1, 1]} : vector<8x128xf32> to vector<1x32xf32>
    %41 = vector.extract_strided_slice %32 {offsets = [4, 0], sizes = [1, 64], strides = [1, 1]} : vector<8x128xf32> to vector<1x64xf32>
    %42 = vector.extract_strided_slice %32 {offsets = [5, 0], sizes = [1, 32], strides = [1, 1]} : vector<8x128xf32> to vector<1x32xf32>
    %43 = vector.extract_strided_slice %32 {offsets = [6, 0], sizes = [1, 32], strides = [1, 1]} : vector<8x128xf32> to vector<1x32xf32>
    %44 = vector.extract_strided_slice %32 {offsets = [7, 0], sizes = [1, 32], strides = [1, 1]} : vector<8x128xf32> to vector<1x32xf32>
    %45 = arith.truncf %26 : vector<8x32xf32> to vector<8x32xbf16>
    %cst_17 = arith.constant dense<0.000000e+00> : vector<8x96xf32>
    %46 = tpu.matmul %45, %33, %cst_17 {dimension_numbers = #tpu.dot_dimension_numbers<[1], [1], [0], [0], [0, 0, 1, 0], [], []>} : vector<8x32xbf16>, vector<96x32xbf16>, vector<8x96xf32> -> vector<8x96xf32>
    %47 = vector.broadcast %37 : vector<1x96xf32> to vector<8x96xf32>
    %48 = arith.addf %46, %47 : vector<8x96xf32>
    %49 = vector.extract_strided_slice %48 {offsets = [0, 0], sizes = [8, 8], strides = [1, 1]} : vector<8x96xf32> to vector<8x8xf32>
    %50 = vector.extract_strided_slice %48 {offsets = [0, 8], sizes = [8, 8], strides = [1, 1]} : vector<8x96xf32> to vector<8x8xf32>
    %51 = vector.extract_strided_slice %48 {offsets = [0, 16], sizes = [8, 8], strides = [1, 1]} : vector<8x96xf32> to vector<8x8xf32>
    %52 = vector.extract_strided_slice %48 {offsets = [0, 24], sizes = [8, 8], strides = [1, 1]} : vector<8x96xf32> to vector<8x8xf32>
    %53 = tpu.concatenate %49, %50, %51, %52 in 0 : vector<8x8xf32>, vector<8x8xf32>, vector<8x8xf32>, vector<8x8xf32> -> vector<32x8xf32>
    %54 = vector.extract_strided_slice %48 {offsets = [0, 32], sizes = [8, 8], strides = [1, 1]} : vector<8x96xf32> to vector<8x8xf32>
    %55 = vector.extract_strided_slice %48 {offsets = [0, 40], sizes = [8, 8], strides = [1, 1]} : vector<8x96xf32> to vector<8x8xf32>
    %56 = vector.extract_strided_slice %48 {offsets = [0, 48], sizes = [8, 8], strides = [1, 1]} : vector<8x96xf32> to vector<8x8xf32>
    %57 = vector.extract_strided_slice %48 {offsets = [0, 56], sizes = [8, 8], strides = [1, 1]} : vector<8x96xf32> to vector<8x8xf32>
    %58 = tpu.concatenate %54, %55, %56, %57 in 0 : vector<8x8xf32>, vector<8x8xf32>, vector<8x8xf32>, vector<8x8xf32> -> vector<32x8xf32>
    %59 = vector.extract_strided_slice %48 {offsets = [0, 64], sizes = [8, 8], strides = [1, 1]} : vector<8x96xf32> to vector<8x8xf32>
    %60 = vector.extract_strided_slice %48 {offsets = [0, 72], sizes = [8, 8], strides = [1, 1]} : vector<8x96xf32> to vector<8x8xf32>
    %61 = vector.extract_strided_slice %48 {offsets = [0, 80], sizes = [8, 8], strides = [1, 1]} : vector<8x96xf32> to vector<8x8xf32>
    %62 = vector.extract_strided_slice %48 {offsets = [0, 88], sizes = [8, 8], strides = [1, 1]} : vector<8x96xf32> to vector<8x8xf32>
    %63 = tpu.concatenate %59, %60, %61, %62 in 0 : vector<8x8xf32>, vector<8x8xf32>, vector<8x8xf32>, vector<8x8xf32> -> vector<32x8xf32>
    %64 = arith.truncf %53 : vector<32x8xf32> to vector<32x8xbf16>
    %65 = arith.truncf %58 : vector<32x8xf32> to vector<32x8xbf16>
    %cst_18 = arith.constant dense<0.000000e+00> : vector<32x32xf32>
    %66 = tpu.matmul %64, %65, %cst_18 {dimension_numbers = #tpu.dot_dimension_numbers<[1], [1], [0], [0], [0, 0, 1, 0], [], []>} : vector<32x8xbf16>, vector<32x8xbf16>, vector<32x32xf32> -> vector<32x32xf32>
    %cst_19 = arith.constant 0.353553385 : f32
    %67 = vector.broadcast %cst_19 : f32 to vector<32x32xf32>
    %68 = arith.mulf %66, %67 : vector<32x32xf32>
    %69 = arith.addf %68, %28 : vector<32x32xf32>
    %cst_20 = arith.constant dense<0xFF800000> : vector<32xf32>
    %70 = vector.multi_reduction <maximumf>, %69, %cst_20 [1] : vector<32x32xf32> to vector<32xf32>
    %71 = vector.shape_cast %70 : vector<32xf32> to vector<32x1xf32>
    %72 = vector.broadcast %71 : vector<32x1xf32> to vector<32x32xf32>
    %73 = arith.subf %69, %72 : vector<32x32xf32>
    %74 = math.exp %73 : vector<32x32xf32>
    %cst_21 = arith.constant dense<0.000000e+00> : vector<32xf32>
    %75 = vector.multi_reduction <add>, %74, %cst_21 [1] : vector<32x32xf32> to vector<32xf32>
    %76 = vector.shape_cast %75 : vector<32xf32> to vector<32x1xf32>
    %77 = vector.broadcast %76 : vector<32x1xf32> to vector<32x32xf32>
    %78 = arith.divf %74, %77 : vector<32x32xf32>
    %79 = arith.truncf %78 : vector<32x32xf32> to vector<32x32xbf16>
    %80 = arith.truncf %63 : vector<32x8xf32> to vector<32x8xbf16>
    %cst_22 = arith.constant dense<0.000000e+00> : vector<32x8xf32>
    %81 = tpu.matmul %79, %80, %cst_22 {dimension_numbers = #tpu.dot_dimension_numbers<[1], [0], [0], [1], [0, 0, 1, 1], [], []>} : vector<32x32xbf16>, vector<32x8xbf16>, vector<32x8xf32> -> vector<32x8xf32>
    %82 = vector.extract_strided_slice %81 {offsets = [0, 0], sizes = [8, 8], strides = [1, 1]} : vector<32x8xf32> to vector<8x8xf32>
    %83 = vector.extract_strided_slice %81 {offsets = [8, 0], sizes = [8, 8], strides = [1, 1]} : vector<32x8xf32> to vector<8x8xf32>
    %84 = vector.extract_strided_slice %81 {offsets = [16, 0], sizes = [8, 8], strides = [1, 1]} : vector<32x8xf32> to vector<8x8xf32>
    %85 = vector.extract_strided_slice %81 {offsets = [24, 0], sizes = [8, 8], strides = [1, 1]} : vector<32x8xf32> to vector<8x8xf32>
    %86 = tpu.concatenate %82, %83, %84, %85 in 1 : vector<8x8xf32>, vector<8x8xf32>, vector<8x8xf32>, vector<8x8xf32> -> vector<8x32xf32>
    %87 = arith.truncf %86 : vector<8x32xf32> to vector<8x32xbf16>
    %cst_23 = arith.constant dense<0.000000e+00> : vector<8x32xf32>
    %88 = tpu.matmul %87, %34, %cst_23 {dimension_numbers = #tpu.dot_dimension_numbers<[1], [1], [0], [0], [0, 0, 1, 0], [], []>} : vector<8x32xbf16>, vector<32x32xbf16>, vector<8x32xf32> -> vector<8x32xf32>
    %89 = vector.broadcast %38 : vector<1x32xf32> to vector<8x32xf32>
    %90 = arith.addf %88, %89 : vector<8x32xf32>
    %91 = arith.addf %90, %26 : vector<8x32xf32>
    %cst_24 = arith.constant dense<0.000000e+00> : vector<8xf32>
    %92 = vector.multi_reduction <add>, %91, %cst_24 [1] : vector<8x32xf32> to vector<8xf32>
    %93 = vector.shape_cast %92 : vector<8xf32> to vector<8x1xf32>
    %cst_25 = arith.constant 3.200000e+01 : f32
    %94 = vector.broadcast %cst_25 : f32 to vector<8x1xf32>
    %95 = arith.divf %93, %94 : vector<8x1xf32>
    %96 = vector.broadcast %95 : vector<8x1xf32> to vector<8x32xf32>
    %97 = arith.subf %91, %96 : vector<8x32xf32>
    %98 = arith.mulf %97, %97 : vector<8x32xf32>
    %cst_26 = arith.constant dense<0.000000e+00> : vector<8xf32>
    %99 = vector.multi_reduction <add>, %98, %cst_26 [1] : vector<8x32xf32> to vector<8xf32>
    %100 = vector.shape_cast %99 : vector<8xf32> to vector<8x1xf32>
    %cst_27 = arith.constant 3.200000e+01 : f32
    %101 = vector.broadcast %cst_27 : f32 to vector<8x1xf32>
    %102 = arith.divf %100, %101 : vector<8x1xf32>
    %103 = vector.broadcast %95 : vector<8x1xf32> to vector<8x32xf32>
    %104 = arith.subf %91, %103 : vector<8x32xf32>
    %cst_28 = arith.constant 9.99999974E-6 : f32
    %105 = vector.broadcast %cst_28 : f32 to vector<8x1xf32>
    %106 = arith.addf %102, %105 : vector<8x1xf32>
    %107 = math.rsqrt %106 : vector<8x1xf32>
    %108 = vector.broadcast %107 : vector<8x1xf32> to vector<8x32xf32>
    %109 = arith.mulf %104, %108 : vector<8x32xf32>
    %110 = vector.broadcast %39 : vector<1x32xf32> to vector<8x32xf32>
    %111 = arith.mulf %109, %110 : vector<8x32xf32>
    %112 = vector.broadcast %40 : vector<1x32xf32> to vector<8x32xf32>
    %113 = arith.addf %111, %112 : vector<8x32xf32>
    %114 = arith.truncf %113 : vector<8x32xf32> to vector<8x32xbf16>
    %cst_29 = arith.constant dense<0.000000e+00> : vector<8x64xf32>
    %115 = tpu.matmul %114, %35, %cst_29 {dimension_numbers = #tpu.dot_dimension_numbers<[1], [1], [0], [0], [0, 0, 1, 0], [], []>} : vector<8x32xbf16>, vector<64x32xbf16>, vector<8x64xf32> -> vector<8x64xf32>
    %116 = vector.broadcast %41 : vector<1x64xf32> to vector<8x64xf32>
    %117 = arith.addf %115, %116 : vector<8x64xf32>
    %cst_30 = arith.constant 5.000000e-01 : f32
    %118 = vector.broadcast %cst_30 : f32 to vector<8x64xf32>
    %119 = arith.mulf %118, %117 : vector<8x64xf32>
    %cst_31 = arith.constant 0.707106769 : f32
    %120 = vector.broadcast %cst_31 : f32 to vector<8x64xf32>
    %121 = arith.mulf %117, %120 : vector<8x64xf32>
    %122 = math.erf %121 : vector<8x64xf32>
    %cst_32 = arith.constant 1.000000e+00 : f32
    %123 = vector.broadcast %cst_32 : f32 to vector<8x64xf32>
    %124 = arith.addf %123, %122 : vector<8x64xf32>
    %125 = arith.mulf %119, %124 : vector<8x64xf32>
    %126 = arith.truncf %125 : vector<8x64xf32> to vector<8x64xbf16>
    %cst_33 = arith.constant dense<0.000000e+00> : vector<8x32xf32>
    %127 = tpu.matmul %126, %36, %cst_33 {dimension_numbers = #tpu.dot_dimension_numbers<[1], [0], [0], [1], [0, 0, 1, 1], [], []>} : vector<8x64xbf16>, vector<64x32xbf16>, vector<8x32xf32> -> vector<8x32xf32>
    %128 = vector.broadcast %42 : vector<1x32xf32> to vector<8x32xf32>
    %129 = arith.addf %127, %128 : vector<8x32xf32>
    %130 = arith.addf %129, %113 : vector<8x32xf32>
    %cst_34 = arith.constant dense<0.000000e+00> : vector<8xf32>
    %131 = vector.multi_reduction <add>, %130, %cst_34 [1] : vector<8x32xf32> to vector<8xf32>
    %132 = vector.shape_cast %131 : vector<8xf32> to vector<8x1xf32>
    %cst_35 = arith.constant 3.200000e+01 : f32
    %133 = vector.broadcast %cst_35 : f32 to vector<8x1xf32>
    %134 = arith.divf %132, %133 : vector<8x1xf32>
    %135 = vector.broadcast %134 : vector<8x1xf32> to vector<8x32xf32>
    %136 = arith.subf %130, %135 : vector<8x32xf32>
    %137 = arith.mulf %136, %136 : vector<8x32xf32>
    %cst_36 = arith.constant dense<0.000000e+00> : vector<8xf32>
    %138 = vector.multi_reduction <add>, %137, %cst_36 [1] : vector<8x32xf32> to vector<8xf32>
    %139 = vector.shape_cast %138 : vector<8xf32> to vector<8x1xf32>
    %cst_37 = arith.constant 3.200000e+01 : f32
    %140 = vector.broadcast %cst_37 : f32 to vector<8x1xf32>
    %141 = arith.divf %139, %140 : vector<8x1xf32>
    %142 = vector.broadcast %134 : vector<8x1xf32> to vector<8x32xf32>
    %143 = arith.subf %130, %142 : vector<8x32xf32>
    %cst_38 = arith.constant 9.99999974E-6 : f32
    %144 = vector.broadcast %cst_38 : f32 to vector<8x1xf32>
    %145 = arith.addf %141, %144 : vector<8x1xf32>
    %146 = math.rsqrt %145 : vector<8x1xf32>
    %147 = vector.broadcast %146 : vector<8x1xf32> to vector<8x32xf32>
    %148 = arith.mulf %143, %147 : vector<8x32xf32>
    %149 = vector.broadcast %43 : vector<1x32xf32> to vector<8x32xf32>
    %150 = arith.mulf %148, %149 : vector<8x32xf32>
    %151 = vector.broadcast %44 : vector<1x32xf32> to vector<8x32xf32>
    %152 = arith.addf %150, %151 : vector<8x32xf32>
    %c1 = arith.constant 1 : index
    %c0_39 = arith.constant 0 : index
    %c0_40 = arith.constant 0 : index
    %153 = vector.load %arg4[%c1, %c0_39, %c0_40] : memref<2x96x128xbf16, #tpu.memory_space<vmem>>, vector<1x96x128xbf16>
    %154 = vector.shape_cast %153 : vector<1x96x128xbf16> to vector<96x128xbf16>
    %c1_41 = arith.constant 1 : index
    %c0_42 = arith.constant 0 : index
    %c0_43 = arith.constant 0 : index
    %155 = vector.load %arg5[%c1_41, %c0_42, %c0_43] : memref<2x8x128xf32, #tpu.memory_space<vmem>>, vector<1x8x128xf32>
    %156 = vector.shape_cast %155 : vector<1x8x128xf32> to vector<8x128xf32>
    %157 = vector.extract_strided_slice %154 {offsets = [0, 0], sizes = [96, 32], strides = [1, 1]} : vector<96x128xbf16> to vector<96x32xbf16>
    %158 = vector.extract_strided_slice %154 {offsets = [0, 32], sizes = [32, 32], strides = [1, 1]} : vector<96x128xbf16> to vector<32x32xbf16>
    %159 = vector.extract_strided_slice %154 {offsets = [0, 64], sizes = [64, 32], strides = [1, 1]} : vector<96x128xbf16> to vector<64x32xbf16>
    %160 = vector.extract_strided_slice %154 {offsets = [0, 96], sizes = [64, 32], strides = [1, 1]} : vector<96x128xbf16> to vector<64x32xbf16>
    %161 = vector.extract_strided_slice %156 {offsets = [0, 0], sizes = [1, 96], strides = [1, 1]} : vector<8x128xf32> to vector<1x96xf32>
    %162 = vector.extract_strided_slice %156 {offsets = [1, 0], sizes = [1, 32], strides = [1, 1]} : vector<8x128xf32> to vector<1x32xf32>
    %163 = vector.extract_strided_slice %156 {offsets = [2, 0], sizes = [1, 32], strides = [1, 1]} : vector<8x128xf32> to vector<1x32xf32>
    %164 = vector.extract_strided_slice %156 {offsets = [3, 0], sizes = [1, 32], strides = [1, 1]} : vector<8x128xf32> to vector<1x32xf32>
    %165 = vector.extract_strided_slice %156 {offsets = [4, 0], sizes = [1, 64], strides = [1, 1]} : vector<8x128xf32> to vector<1x64xf32>
    %166 = vector.extract_strided_slice %156 {offsets = [5, 0], sizes = [1, 32], strides = [1, 1]} : vector<8x128xf32> to vector<1x32xf32>
    %167 = vector.extract_strided_slice %156 {offsets = [6, 0], sizes = [1, 32], strides = [1, 1]} : vector<8x128xf32> to vector<1x32xf32>
    %168 = vector.extract_strided_slice %156 {offsets = [7, 0], sizes = [1, 32], strides = [1, 1]} : vector<8x128xf32> to vector<1x32xf32>
    %169 = arith.truncf %152 : vector<8x32xf32> to vector<8x32xbf16>
    %cst_44 = arith.constant dense<0.000000e+00> : vector<8x96xf32>
    %170 = tpu.matmul %169, %157, %cst_44 {dimension_numbers = #tpu.dot_dimension_numbers<[1], [1], [0], [0], [0, 0, 1, 0], [], []>} : vector<8x32xbf16>, vector<96x32xbf16>, vector<8x96xf32> -> vector<8x96xf32>
    %171 = vector.broadcast %161 : vector<1x96xf32> to vector<8x96xf32>
    %172 = arith.addf %170, %171 : vector<8x96xf32>
    %173 = vector.extract_strided_slice %172 {offsets = [0, 0], sizes = [8, 8], strides = [1, 1]} : vector<8x96xf32> to vector<8x8xf32>
    %174 = vector.extract_strided_slice %172 {offsets = [0, 8], sizes = [8, 8], strides = [1, 1]} : vector<8x96xf32> to vector<8x8xf32>
    %175 = vector.extract_strided_slice %172 {offsets = [0, 16], sizes = [8, 8], strides = [1, 1]} : vector<8x96xf32> to vector<8x8xf32>
    %176 = vector.extract_strided_slice %172 {offsets = [0, 24], sizes = [8, 8], strides = [1, 1]} : vector<8x96xf32> to vector<8x8xf32>
    %177 = tpu.concatenate %173, %174, %175, %176 in 0 : vector<8x8xf32>, vector<8x8xf32>, vector<8x8xf32>, vector<8x8xf32> -> vector<32x8xf32>
    %178 = vector.extract_strided_slice %172 {offsets = [0, 32], sizes = [8, 8], strides = [1, 1]} : vector<8x96xf32> to vector<8x8xf32>
    %179 = vector.extract_strided_slice %172 {offsets = [0, 40], sizes = [8, 8], strides = [1, 1]} : vector<8x96xf32> to vector<8x8xf32>
    %180 = vector.extract_strided_slice %172 {offsets = [0, 48], sizes = [8, 8], strides = [1, 1]} : vector<8x96xf32> to vector<8x8xf32>
    %181 = vector.extract_strided_slice %172 {offsets = [0, 56], sizes = [8, 8], strides = [1, 1]} : vector<8x96xf32> to vector<8x8xf32>
    %182 = tpu.concatenate %178, %179, %180, %181 in 0 : vector<8x8xf32>, vector<8x8xf32>, vector<8x8xf32>, vector<8x8xf32> -> vector<32x8xf32>
    %183 = vector.extract_strided_slice %172 {offsets = [0, 64], sizes = [8, 8], strides = [1, 1]} : vector<8x96xf32> to vector<8x8xf32>
    %184 = vector.extract_strided_slice %172 {offsets = [0, 72], sizes = [8, 8], strides = [1, 1]} : vector<8x96xf32> to vector<8x8xf32>
    %185 = vector.extract_strided_slice %172 {offsets = [0, 80], sizes = [8, 8], strides = [1, 1]} : vector<8x96xf32> to vector<8x8xf32>
    %186 = vector.extract_strided_slice %172 {offsets = [0, 88], sizes = [8, 8], strides = [1, 1]} : vector<8x96xf32> to vector<8x8xf32>
    %187 = tpu.concatenate %183, %184, %185, %186 in 0 : vector<8x8xf32>, vector<8x8xf32>, vector<8x8xf32>, vector<8x8xf32> -> vector<32x8xf32>
    %188 = arith.truncf %177 : vector<32x8xf32> to vector<32x8xbf16>
    %189 = arith.truncf %182 : vector<32x8xf32> to vector<32x8xbf16>
    %cst_45 = arith.constant dense<0.000000e+00> : vector<32x32xf32>
    %190 = tpu.matmul %188, %189, %cst_45 {dimension_numbers = #tpu.dot_dimension_numbers<[1], [1], [0], [0], [0, 0, 1, 0], [], []>} : vector<32x8xbf16>, vector<32x8xbf16>, vector<32x32xf32> -> vector<32x32xf32>
    %cst_46 = arith.constant 0.353553385 : f32
    %191 = vector.broadcast %cst_46 : f32 to vector<32x32xf32>
    %192 = arith.mulf %190, %191 : vector<32x32xf32>
    %193 = arith.addf %192, %28 : vector<32x32xf32>
    %cst_47 = arith.constant dense<0xFF800000> : vector<32xf32>
    %194 = vector.multi_reduction <maximumf>, %193, %cst_47 [1] : vector<32x32xf32> to vector<32xf32>
    %195 = vector.shape_cast %194 : vector<32xf32> to vector<32x1xf32>
    %196 = vector.broadcast %195 : vector<32x1xf32> to vector<32x32xf32>
    %197 = arith.subf %193, %196 : vector<32x32xf32>
    %198 = math.exp %197 : vector<32x32xf32>
    %cst_48 = arith.constant dense<0.000000e+00> : vector<32xf32>
    %199 = vector.multi_reduction <add>, %198, %cst_48 [1] : vector<32x32xf32> to vector<32xf32>
    %200 = vector.shape_cast %199 : vector<32xf32> to vector<32x1xf32>
    %201 = vector.broadcast %200 : vector<32x1xf32> to vector<32x32xf32>
    %202 = arith.divf %198, %201 : vector<32x32xf32>
    %203 = arith.truncf %202 : vector<32x32xf32> to vector<32x32xbf16>
    %204 = arith.truncf %187 : vector<32x8xf32> to vector<32x8xbf16>
    %cst_49 = arith.constant dense<0.000000e+00> : vector<32x8xf32>
    %205 = tpu.matmul %203, %204, %cst_49 {dimension_numbers = #tpu.dot_dimension_numbers<[1], [0], [0], [1], [0, 0, 1, 1], [], []>} : vector<32x32xbf16>, vector<32x8xbf16>, vector<32x8xf32> -> vector<32x8xf32>
    %206 = vector.extract_strided_slice %205 {offsets = [0, 0], sizes = [8, 8], strides = [1, 1]} : vector<32x8xf32> to vector<8x8xf32>
    %207 = vector.extract_strided_slice %205 {offsets = [8, 0], sizes = [8, 8], strides = [1, 1]} : vector<32x8xf32> to vector<8x8xf32>
    %208 = vector.extract_strided_slice %205 {offsets = [16, 0], sizes = [8, 8], strides = [1, 1]} : vector<32x8xf32> to vector<8x8xf32>
    %209 = vector.extract_strided_slice %205 {offsets = [24, 0], sizes = [8, 8], strides = [1, 1]} : vector<32x8xf32> to vector<8x8xf32>
    %210 = tpu.concatenate %206, %207, %208, %209 in 1 : vector<8x8xf32>, vector<8x8xf32>, vector<8x8xf32>, vector<8x8xf32> -> vector<8x32xf32>
    %211 = arith.truncf %210 : vector<8x32xf32> to vector<8x32xbf16>
    %cst_50 = arith.constant dense<0.000000e+00> : vector<8x32xf32>
    %212 = tpu.matmul %211, %158, %cst_50 {dimension_numbers = #tpu.dot_dimension_numbers<[1], [1], [0], [0], [0, 0, 1, 0], [], []>} : vector<8x32xbf16>, vector<32x32xbf16>, vector<8x32xf32> -> vector<8x32xf32>
    %213 = vector.broadcast %162 : vector<1x32xf32> to vector<8x32xf32>
    %214 = arith.addf %212, %213 : vector<8x32xf32>
    %215 = arith.addf %214, %152 : vector<8x32xf32>
    %cst_51 = arith.constant dense<0.000000e+00> : vector<8xf32>
    %216 = vector.multi_reduction <add>, %215, %cst_51 [1] : vector<8x32xf32> to vector<8xf32>
    %217 = vector.shape_cast %216 : vector<8xf32> to vector<8x1xf32>
    %cst_52 = arith.constant 3.200000e+01 : f32
    %218 = vector.broadcast %cst_52 : f32 to vector<8x1xf32>
    %219 = arith.divf %217, %218 : vector<8x1xf32>
    %220 = vector.broadcast %219 : vector<8x1xf32> to vector<8x32xf32>
    %221 = arith.subf %215, %220 : vector<8x32xf32>
    %222 = arith.mulf %221, %221 : vector<8x32xf32>
    %cst_53 = arith.constant dense<0.000000e+00> : vector<8xf32>
    %223 = vector.multi_reduction <add>, %222, %cst_53 [1] : vector<8x32xf32> to vector<8xf32>
    %224 = vector.shape_cast %223 : vector<8xf32> to vector<8x1xf32>
    %cst_54 = arith.constant 3.200000e+01 : f32
    %225 = vector.broadcast %cst_54 : f32 to vector<8x1xf32>
    %226 = arith.divf %224, %225 : vector<8x1xf32>
    %227 = vector.broadcast %219 : vector<8x1xf32> to vector<8x32xf32>
    %228 = arith.subf %215, %227 : vector<8x32xf32>
    %cst_55 = arith.constant 9.99999974E-6 : f32
    %229 = vector.broadcast %cst_55 : f32 to vector<8x1xf32>
    %230 = arith.addf %226, %229 : vector<8x1xf32>
    %231 = math.rsqrt %230 : vector<8x1xf32>
    %232 = vector.broadcast %231 : vector<8x1xf32> to vector<8x32xf32>
    %233 = arith.mulf %228, %232 : vector<8x32xf32>
    %234 = vector.broadcast %163 : vector<1x32xf32> to vector<8x32xf32>
    %235 = arith.mulf %233, %234 : vector<8x32xf32>
    %236 = vector.broadcast %164 : vector<1x32xf32> to vector<8x32xf32>
    %237 = arith.addf %235, %236 : vector<8x32xf32>
    %238 = arith.truncf %237 : vector<8x32xf32> to vector<8x32xbf16>
    %cst_56 = arith.constant dense<0.000000e+00> : vector<8x64xf32>
    %239 = tpu.matmul %238, %159, %cst_56 {dimension_numbers = #tpu.dot_dimension_numbers<[1], [1], [0], [0], [0, 0, 1, 0], [], []>} : vector<8x32xbf16>, vector<64x32xbf16>, vector<8x64xf32> -> vector<8x64xf32>
    %240 = vector.broadcast %165 : vector<1x64xf32> to vector<8x64xf32>
    %241 = arith.addf %239, %240 : vector<8x64xf32>
    %cst_57 = arith.constant 5.000000e-01 : f32
    %242 = vector.broadcast %cst_57 : f32 to vector<8x64xf32>
    %243 = arith.mulf %242, %241 : vector<8x64xf32>
    %cst_58 = arith.constant 0.707106769 : f32
    %244 = vector.broadcast %cst_58 : f32 to vector<8x64xf32>
    %245 = arith.mulf %241, %244 : vector<8x64xf32>
    %246 = math.erf %245 : vector<8x64xf32>
    %cst_59 = arith.constant 1.000000e+00 : f32
    %247 = vector.broadcast %cst_59 : f32 to vector<8x64xf32>
    %248 = arith.addf %247, %246 : vector<8x64xf32>
    %249 = arith.mulf %243, %248 : vector<8x64xf32>
    %250 = arith.truncf %249 : vector<8x64xf32> to vector<8x64xbf16>
    %cst_60 = arith.constant dense<0.000000e+00> : vector<8x32xf32>
    %251 = tpu.matmul %250, %160, %cst_60 {dimension_numbers = #tpu.dot_dimension_numbers<[1], [0], [0], [1], [0, 0, 1, 1], [], []>} : vector<8x64xbf16>, vector<64x32xbf16>, vector<8x32xf32> -> vector<8x32xf32>
    %252 = vector.broadcast %166 : vector<1x32xf32> to vector<8x32xf32>
    %253 = arith.addf %251, %252 : vector<8x32xf32>
    %254 = arith.addf %253, %237 : vector<8x32xf32>
    %cst_61 = arith.constant dense<0.000000e+00> : vector<8xf32>
    %255 = vector.multi_reduction <add>, %254, %cst_61 [1] : vector<8x32xf32> to vector<8xf32>
    %256 = vector.shape_cast %255 : vector<8xf32> to vector<8x1xf32>
    %cst_62 = arith.constant 3.200000e+01 : f32
    %257 = vector.broadcast %cst_62 : f32 to vector<8x1xf32>
    %258 = arith.divf %256, %257 : vector<8x1xf32>
    %259 = vector.broadcast %258 : vector<8x1xf32> to vector<8x32xf32>
    %260 = arith.subf %254, %259 : vector<8x32xf32>
    %261 = arith.mulf %260, %260 : vector<8x32xf32>
    %cst_63 = arith.constant dense<0.000000e+00> : vector<8xf32>
    %262 = vector.multi_reduction <add>, %261, %cst_63 [1] : vector<8x32xf32> to vector<8xf32>
    %263 = vector.shape_cast %262 : vector<8xf32> to vector<8x1xf32>
    %cst_64 = arith.constant 3.200000e+01 : f32
    %264 = vector.broadcast %cst_64 : f32 to vector<8x1xf32>
    %265 = arith.divf %263, %264 : vector<8x1xf32>
    %266 = vector.broadcast %258 : vector<8x1xf32> to vector<8x32xf32>
    %267 = arith.subf %254, %266 : vector<8x32xf32>
    %cst_65 = arith.constant 9.99999974E-6 : f32
    %268 = vector.broadcast %cst_65 : f32 to vector<8x1xf32>
    %269 = arith.addf %265, %268 : vector<8x1xf32>
    %270 = math.rsqrt %269 : vector<8x1xf32>
    %271 = vector.broadcast %270 : vector<8x1xf32> to vector<8x32xf32>
    %272 = arith.mulf %267, %271 : vector<8x32xf32>
    %273 = vector.broadcast %167 : vector<1x32xf32> to vector<8x32xf32>
    %274 = arith.mulf %272, %273 : vector<8x32xf32>
    %275 = vector.broadcast %168 : vector<1x32xf32> to vector<8x32xf32>
    %276 = arith.addf %274, %275 : vector<8x32xf32>
    %277 = vector.extract_strided_slice %276 {offsets = [0, 0], sizes = [1, 32], strides = [1, 1]} : vector<8x32xf32> to vector<1x32xf32>
    %c0_66 = arith.constant 0 : index
    %c32 = arith.constant 32 : index
    %278 = vector.load %arg6[%c0_66, %c32] : memref<128x128xbf16, #tpu.memory_space<vmem>>, vector<32x32xbf16>
    %c0_67 = arith.constant 0 : index
    %c0_68 = arith.constant 0 : index
    %279 = vector.load %arg6[%c0_67, %c0_68] : memref<128x128xbf16, #tpu.memory_space<vmem>>, vector<128x32xbf16>
    %280 = arith.truncf %277 : vector<1x32xf32> to vector<1x32xbf16>
    %cst_69 = arith.constant dense<0.000000e+00> : vector<1x32xf32>
    %281 = tpu.matmul %280, %278, %cst_69 {dimension_numbers = #tpu.dot_dimension_numbers<[1], [1], [0], [0], [0, 0, 1, 0], [], []>} : vector<1x32xbf16>, vector<32x32xbf16>, vector<1x32xf32> -> vector<1x32xf32>
    %282 = vector.extract_strided_slice %0 {offsets = [2, 0], sizes = [1, 32], strides = [1, 1]} : vector<4x128xf32> to vector<1x32xf32>
    %283 = arith.addf %281, %282 : vector<1x32xf32>
    %284 = math.tanh %283 : vector<1x32xf32>
    %285 = arith.truncf %284 : vector<1x32xf32> to vector<1x32xbf16>
    %cst_70 = arith.constant dense<0.000000e+00> : vector<1x128xf32>
    %286 = tpu.matmul %285, %279, %cst_70 {dimension_numbers = #tpu.dot_dimension_numbers<[1], [1], [0], [0], [0, 0, 1, 0], [], []>} : vector<1x32xbf16>, vector<128x32xbf16>, vector<1x128xf32> -> vector<1x128xf32>
    %287 = vector.extract_strided_slice %0 {offsets = [3, 0], sizes = [1, 128], strides = [1, 1]} : vector<4x128xf32> to vector<1x128xf32>
    %288 = arith.addf %286, %287 : vector<1x128xf32>
    %c0_71 = arith.constant 0 : index
    %c0_72 = arith.constant 0 : index
    %c0_73 = arith.constant 0 : index
    %289 = vector.load %arg7[%c0_71, %c0_72, %c0_73] : memref<1x1x128xf32, #tpu.memory_space<vmem>>, vector<1x1x128xf32>
    %290 = vector.shape_cast %289 : vector<1x1x128xf32> to vector<1x128xf32>
    %291 = vector.shape_cast %288 : vector<1x128xf32> to vector<1x1x128xf32>
    tpu.vector_store %arg7[%c0_71, %c0_72, %c0_73], %291 {strides = array<i32>} : memref<1x1x128xf32, #tpu.memory_space<vmem>>, vector<1x1x128xf32>,
    return
  }
  func.func @transform_0(%arg0: i32) -> (i32, i32, i32) {
    %c0_i32 = arith.constant 0 : i32
    %c0_i32_0 = arith.constant 0 : i32
    %c0_i32_1 = arith.constant 0 : i32
    return %arg0, %c0_i32, %c0_i32_0 : i32, i32, i32
  }
  func.func @transform_1(%arg0: i32) -> (i32, i32, i32) {
    %c0_i32 = arith.constant 0 : i32
    %c0_i32_0 = arith.constant 0 : i32
    %c0_i32_1 = arith.constant 0 : i32
    return %arg0, %c0_i32, %c0_i32_0 : i32, i32, i32
  }
  func.func @transform_2(%arg0: i32) -> (i32, i32) {
    %c0_i32 = arith.constant 0 : i32
    %c0_i32_0 = arith.constant 0 : i32
    %c0_i32_1 = arith.constant 0 : i32
    return %c0_i32, %c0_i32_0 : i32, i32
  }
  func.func @transform_3(%arg0: i32) -> (i32, i32, i32) {
    %c0_i32 = arith.constant 0 : i32
    %c0_i32_0 = arith.constant 0 : i32
    %c0_i32_1 = arith.constant 0 : i32
    %c0_i32_2 = arith.constant 0 : i32
    return %c0_i32, %c0_i32_0, %c0_i32_1 : i32, i32, i32
  }
  func.func @transform_4(%arg0: i32) -> (i32, i32, i32) {
    %c0_i32 = arith.constant 0 : i32
    %c0_i32_0 = arith.constant 0 : i32
    %c0_i32_1 = arith.constant 0 : i32
    %c0_i32_2 = arith.constant 0 : i32
    return %c0_i32, %c0_i32_0, %c0_i32_1 : i32, i32, i32
  }
  func.func @transform_5(%arg0: i32) -> (i32, i32) {
    %c0_i32 = arith.constant 0 : i32
    %c0_i32_0 = arith.constant 0 : i32
    %c0_i32_1 = arith.constant 0 : i32
    return %c0_i32, %c0_i32_0 : i32, i32
  }
  func.func @transform_6(%arg0: i32) -> (i32, i32, i32) {
    %c0_i32 = arith.constant 0 : i32
    %c0_i32_0 = arith.constant 0 : i32
    %c0_i32_1 = arith.constant 0 : i32
    return %arg0, %c0_i32, %c0_i32_0 : i32, i32, i32
  }
}

</mosaic_0001>

<llo_original>
// kernel: transformer_multi_classifier.1
$region0: #{transformer_multi_classifier.1}
  #allocation0 [shape = 'u32[]', space=smem, size = 0x4, offset = 0x4, fixed_abs, tag = 'smem constant byte address 0x4 - core index']
  #allocation1 [shape = 'u32[144,128]{1,0:T(1,128)}', space=vmem, size = 0x12000, scoped, tag = 'internal scratch']
  %s0 = inlined_call_operand.vmem [shape: f32[2,8,32], index: 0, kind: input, shape index: {}]
  %s1 = inlined_call_operand.vmem [shape: f32[2,32,32], index: 1, kind: input, shape index: {}]
  %s2 = inlined_call_operand.vmem [shape: f32[4,128], index: 2, kind: input, shape index: {}]
  %s3 = inlined_call_operand.vmem [shape: bf16[2,96,128], index: 3, kind: input, shape index: {}]
  %s4 = inlined_call_operand.vmem [shape: f32[2,8,128], index: 4, kind: input, shape index: {}]
  %s5 = inlined_call_operand.vmem [shape: bf16[128,128], index: 5, kind: input, shape index: {}]
  %s6 = inlined_call_operand.hbm [shape: f32[2,1,128], index: 6, kind: output, shape index: {}]
  %s7 = sld [smem:[#allocation0]]
  $region57: #{transformer_multi_classifier.1} parent=0
    _
  %s9 = ssub.s32 1, %s7
  %s10 = scalar_select 0, %s9, %s7
  $region1: #{transformer_multi_classifier.1} parent=0
    #allocation2 [shape = 'u8[1024]{0}', space=vmem, size = 0x400, scoped, tag = 'output window, operand 0']
    #allocation3 [shape = 's32[2]{0}', space=sflag, size = 0x8, scoped, tag = 'scoped memory for transformer_multi_classifier.1']
    %11 = vsyncpa [#allocation3], 0
    %s12 = scalar_lea.sflag [#allocation3], 1
    %13 = vsyncpa %s12, 0
    loop: start=0, step=1, limit=4
    $region2: #{transformer_multi_classifier.1} parent=1 // loop_pre_header
      _
    $region3: #{transformer_multi_classifier.1} parent=1 // loop_header
      %s15 = sphi 0, %s19
      %p16 = scmp.ge.s32.totalorder %s15, 4
      %s25 = sphi 0, %s27
      %s28 = sphi 0, %s25
      %s29 = sphi 0, %s28
      %s45 = sphi 0, %s29
      %s51 = sphi 0, %s53
      %s54 = sphi 0, %s51
      %s55 = sphi 0, %s54
      %s71 = sphi 0, %s55
      %s75 = sphi 0, %s75
      %s77 = sphi 0, %s75
      %s78 = sphi 0, %s77
      %s92 = sphi 0, %s78
      %s96 = sphi 0, %s96
      %s98 = sphi 0, %s96
      %s99 = sphi 0, %s98
      %s113 = sphi 0, %s99
      %s117 = sphi 0, %s117
      %s119 = sphi 0, %s117
      %s120 = sphi 0, %s119
      %s134 = sphi 0, %s120
      %s138 = sphi 0, %s138
      %s140 = sphi 0, %s138
      %s141 = sphi 0, %s140
      %s155 = sphi 0, %s141
      %s161 = sphi 0, %s163
      %s164 = sphi 0, %s161
      %s165 = sphi 0, %s164
      %s181 = sphi 0, %s165
    $region4: #{transformer_multi_classifier.1} parent=1 // loop_header_branch
      %18 = sbr.rel (%p16) target = $region8
    $region5: #{transformer_multi_classifier.1} parent=1 // loop_body
      %s20 = ssub.s32 %s15, 1
      %s21 = ssub.s32 %s15, 2
      %s22 = sadd.s32 %s15, 1
      %s23 = ssub.s32 %s15, %s22
      %p24 = scmp.eq.s32.totalorder %s23, 0
      %s26 = sadd.s32 %s25, 1
      %s27 = scalar_select %p24, %s25, %s26
      %p30 = pneg %p24
      %p31 = scmp.eq.s32.totalorder %s15, 1
      %p32 = por %p30, %p31
      %p33 = scmp.ne.s32.totalorder %s25, %s28
      %p34 = scmp.eq.s32.totalorder %s15, 0
      %p35 = por %p33, %p34
      %p36 = scmp.ne.s32.totalorder %s25, %s28
      %p37 = scmp.eq.s32.totalorder %s20, 1
      %p38 = por %p36, %p37
      %p39 = scmp.ne.s32.totalorder %s28, %s29
      %p40 = scmp.eq.s32.totalorder %s20, 0
      %p41 = por %p39, %p40
      %p42 = scmp.ne.s32.totalorder %s28, %s29
      %p43 = scmp.eq.s32.totalorder %s21, 1
      %p44 = por %p42, %p43
      %p46 = scmp.ne.s32.totalorder %s29, %s45
      %p47 = scmp.eq.s32.totalorder %s21, 0
      %p48 = por %p46, %p47
      %s49 = ssub.s32 %s15, %s22
      %p50 = scmp.eq.s32.totalorder %s49, 0
      %s52 = sadd.s32 %s51, 1
      %s53 = scalar_select %p50, %s51, %s52
      %p56 = pneg %p50
      %p57 = scmp.eq.s32.totalorder %s15, 1
      %p58 = por %p56, %p57
      %p59 = scmp.ne.s32.totalorder %s51, %s54
      %p60 = scmp.eq.s32.totalorder %s15, 0
      %p61 = por %p59, %p60
      %p62 = scmp.ne.s32.totalorder %s51, %s54
      %p63 = scmp.eq.s32.totalorder %s20, 1
      %p64 = por %p62, %p63
      %p65 = scmp.ne.s32.totalorder %s54, %s55
      %p66 = scmp.eq.s32.totalorder %s20, 0
      %p67 = por %p65, %p66
      %p68 = scmp.ne.s32.totalorder %s54, %s55
      %p69 = scmp.eq.s32.totalorder %s21, 1
      %p70 = por %p68, %p69
      %p72 = scmp.ne.s32.totalorder %s55, %s71
      %p73 = scmp.eq.s32.totalorder %s21, 0
      %p74 = por %p72, %p73
      %s76 = sadd.s32 %s75, 1
      %p79 = scmp.eq.s32.totalorder %s15, 1
      %p80 = scmp.ne.s32.totalorder %s75, %s77
      %p81 = scmp.eq.s32.totalorder %s15, 0
      %p82 = por %p80, %p81
      %p83 = scmp.ne.s32.totalorder %s75, %s77
      %p84 = scmp.eq.s32.totalorder %s20, 1
      %p85 = por %p83, %p84
      %p86 = scmp.ne.s32.totalorder %s77, %s78
      %p87 = scmp.eq.s32.totalorder %s20, 0
      %p88 = por %p86, %p87
      %p89 = scmp.ne.s32.totalorder %s77, %s78
      %p90 = scmp.eq.s32.totalorder %s21, 1
      %p91 = por %p89, %p90
      %p93 = scmp.ne.s32.totalorder %s78, %s92
      %p94 = scmp.eq.s32.totalorder %s21, 0
      %p95 = por %p93, %p94
      %s97 = sadd.s32 %s96, 1
      %p100 = scmp.eq.s32.totalorder %s15, 1
      %p101 = scmp.ne.s32.totalorder %s96, %s98
      %p102 = scmp.eq.s32.totalorder %s15, 0
      %p103 = por %p101, %p102
      %p104 = scmp.ne.s32.totalorder %s96, %s98
      %p105 = scmp.eq.s32.totalorder %s20, 1
      %p106 = por %p104, %p105
      %p107 = scmp.ne.s32.totalorder %s98, %s99
      %p108 = scmp.eq.s32.totalorder %s20, 0
      %p109 = por %p107, %p108
      %p110 = scmp.ne.s32.totalorder %s98, %s99
      %p111 = scmp.eq.s32.totalorder %s21, 1
      %p112 = por %p110, %p111
      %p114 = scmp.ne.s32.totalorder %s99, %s113
      %p115 = scmp.eq.s32.totalorder %s21, 0
      %p116 = por %p114, %p115
      %s118 = sadd.s32 %s117, 1
      %p121 = scmp.eq.s32.totalorder %s15, 1
      %p122 = scmp.ne.s32.totalorder %s117, %s119
      %p123 = scmp.eq.s32.totalorder %s15, 0
      %p124 = por %p122, %p123
      %p125 = scmp.ne.s32.totalorder %s117, %s119
      %p126 = scmp.eq.s32.totalorder %s20, 1
      %p127 = por %p125, %p126
      %p128 = scmp.ne.s32.totalorder %s119, %s120
      %p129 = scmp.eq.s32.totalorder %s20, 0
      %p130 = por %p128, %p129
      %p131 = scmp.ne.s32.totalorder %s119, %s120
      %p132 = scmp.eq.s32.totalorder %s21, 1
      %p133 = por %p131, %p132
      %p135 = scmp.ne.s32.totalorder %s120, %s134
      %p136 = scmp.eq.s32.totalorder %s21, 0
      %p137 = por %p135, %p136
      %s139 = sadd.s32 %s138, 1
      %p142 = scmp.eq.s32.totalorder %s15, 1
      %p143 = scmp.ne.s32.totalorder %s138, %s140
      %p144 = scmp.eq.s32.totalorder %s15, 0
      %p145 = por %p143, %p144
      %p146 = scmp.ne.s32.totalorder %s138, %s140
      %p147 = scmp.eq.s32.totalorder %s20, 1
      %p148 = por %p146, %p147
      %p149 = scmp.ne.s32.totalorder %s140, %s141
      %p150 = scmp.eq.s32.totalorder %s20, 0
      %p151 = por %p149, %p150
      %p152 = scmp.ne.s32.totalorder %s140, %s141
      %p153 = scmp.eq.s32.totalorder %s21, 1
      %p154 = por %p152, %p153
      %p156 = scmp.ne.s32.totalorder %s141, %s155
      %p157 = scmp.eq.s32.totalorder %s21, 0
      %p158 = por %p156, %p157
      %s159 = ssub.s32 %s15, %s22
      %p160 = scmp.eq.s32.totalorder %s159, 0
      %s162 = sadd.s32 %s161, 1
      %s163 = scalar_select %p160, %s161, %s162
      %p166 = pneg %p160
      %p167 = scmp.eq.s32.totalorder %s15, 1
      %p168 = por %p166, %p167
      %p169 = scmp.ne.s32.totalorder %s161, %s164
      %p170 = scmp.eq.s32.totalorder %s15, 0
      %p171 = por %p169, %p170
      %p172 = scmp.ne.s32.totalorder %s161, %s164
      %p173 = scmp.eq.s32.totalorder %s20, 1
      %p174 = por %p172, %p173
      %p175 = scmp.ne.s32.totalorder %s164, %s165
      %p176 = scmp.eq.s32.totalorder %s20, 0
      %p177 = por %p175, %p176
      %p178 = scmp.ne.s32.totalorder %s164, %s165
      %p179 = scmp.eq.s32.totalorder %s21, 1
      %p180 = por %p178, %p179
      %p182 = scmp.ne.s32.totalorder %s165, %s181
      %p183 = scmp.eq.s32.totalorder %s21, 0
      %p184 = por %p182, %p183
      %p185 = scmp.le.s32.totalorder 1, %s15
      %p186 = scmp.lt.s32.totalorder %s15, 3
      %p187 = pnand %p185, %p186
      %p188 = pneg %p187
      // Predicated region
      $region9: #{transformer_multi_classifier.1} parent=5 // pred_check
        _
      $region10: #{transformer_multi_classifier.1} parent=5 // pred_check_branch
        %190 = sbr.rel (%p187) target = $region12
      $region11: #{transformer_multi_classifier.1} parent=5 // pred_region
        %s191 = ssub.s32 %s15, 1
        // Predicated region
        $region13: #{transformer_multi_classifier.1} parent=11 // pred_check
          %p192 = pneg %p88
        $region14: #{transformer_multi_classifier.1} parent=11 // pred_check_branch
          %194 = sbr.rel (%p192) target = $region16
        $region15: #{transformer_multi_classifier.1} parent=11 // pred_region
          _
        $region16: #{transformer_multi_classifier.1} parent=11 // pred_fallthru
          _
        // Predicated region
        $region17: #{transformer_multi_classifier.1} parent=11 // pred_check
          %p195 = pneg %p109
        $region18: #{transformer_multi_classifier.1} parent=11 // pred_check_branch
          %197 = sbr.rel (%p195) target = $region20
        $region19: #{transformer_multi_classifier.1} parent=11 // pred_region
          _
        $region20: #{transformer_multi_classifier.1} parent=11 // pred_fallthru
          _
        // Predicated region
        $region21: #{transformer_multi_classifier.1} parent=11 // pred_check
          %p198 = pneg %p130
        $region22: #{transformer_multi_classifier.1} parent=11 // pred_check_branch
          %200 = sbr.rel (%p198) target = $region24
        $region23: #{transformer_multi_classifier.1} parent=11 // pred_region
          _
        $region24: #{transformer_multi_classifier.1} parent=11 // pred_fallthru
          _
        // Predicated region
        $region25: #{transformer_multi_classifier.1} parent=11 // pred_check
          %p201 = pneg %p151
        $region26: #{transformer_multi_classifier.1} parent=11 // pred_check_branch
          %203 = sbr.rel (%p201) target = $region28
        $region27: #{transformer_multi_classifier.1} parent=11 // pred_region
          _
        $region28: #{transformer_multi_classifier.1} parent=11 // pred_fallthru
          _
      $region12: #{transformer_multi_classifier.1} parent=5 // pred_fallthru
        _
      %p204 = scmp.lt.s32.totalorder %s15, 2
      // Predicated region
      $region29: #{transformer_multi_classifier.1} parent=5 // pred_check
        %p205 = pneg %p204
      $region30: #{transformer_multi_classifier.1} parent=5 // pred_check_branch
        %207 = sbr.rel (%p205) target = $region32
      $region31: #{transformer_multi_classifier.1} parent=5 // pred_region
        // Predicated region
        $region33: #{transformer_multi_classifier.1} parent=31 // pred_check
          %p208 = pneg %p35
        $region34: #{transformer_multi_classifier.1} parent=31 // pred_check_branch
          %210 = sbr.rel (%p208) target = $region36
        $region35: #{transformer_multi_classifier.1} parent=31 // pred_region
          %p211 = scmp.lt.s32.totalorder %s15, 1
          %s212 = scalar_select %p211, %s15, 1
          %s213 = smul.addr %s212, 8
          %s214 = scalar_lea.vmem %s0, %s213
        $region36: #{transformer_multi_classifier.1} parent=31 // pred_fallthru
          _
        // Predicated region
        $region37: #{transformer_multi_classifier.1} parent=31 // pred_check
          %p215 = pneg %p61
        $region38: #{transformer_multi_classifier.1} parent=31 // pred_check_branch
          %217 = sbr.rel (%p215) target = $region40
        $region39: #{transformer_multi_classifier.1} parent=31 // pred_region
          %p218 = scmp.lt.s32.totalorder %s15, 1
          %s219 = scalar_select %p218, %s15, 1
          %s220 = smul.addr %s219, 4
          %s221 = smul.addr %s220, 8
          %s222 = scalar_lea.vmem %s1, %s221
        $region40: #{transformer_multi_classifier.1} parent=31 // pred_fallthru
          _
      $region32: #{transformer_multi_classifier.1} parent=5 // pred_fallthru
        _
      %p223 = scmp.le.s32.totalorder 1, %s15
      %p224 = scmp.lt.s32.totalorder %s15, 3
      %p225 = pnand %p223, %p224
      %p226 = pneg %p225
      // Predicated region
      $region41: #{transformer_multi_classifier.1} parent=5 // pred_check
        _
      $region42: #{transformer_multi_classifier.1} parent=5 // pred_check_branch
        %228 = sbr.rel (%p225) target = $region44
      $region43: #{transformer_multi_classifier.1} parent=5 // pred_region
        %s229 = ssub.s32 %s15, 1
        %p230 = scmp.lt.s32.totalorder %s20, 1
        %s231 = scalar_select %p230, %s20, 1
        %s232 = smul.addr %s231, 8
        %s233 = scalar_lea.vmem %s0, %s232
        %p234 = pneg %p41
        %p235 = pneg %p38
        %p236 = scmp.lt.s32.totalorder %s20, 1
        %s237 = scalar_select %p236, %s20, 1
        %s238 = smul.addr %s237, 4
        %s239 = smul.addr %s238, 8
        %s240 = scalar_lea.vmem %s1, %s239
        %p241 = pneg %p67
        %p242 = pneg %p64
        %p243 = pneg %p88
        %p244 = pneg %p85
        %p245 = pneg %p109
        %p246 = pneg %p106
        %p247 = pneg %p130
        %p248 = pneg %p127
        %p249 = pneg %p151
        %p250 = pneg %p148
        %p251 = pneg %p177
        %p252 = pneg %p174
        %s253 = sand.u32 %s164, 1
        %s254 = scalar_lea.sflag [#allocation3], %s253
        %s255 = sand.u32 %s164, 1
        %s256 = scalar_lea.vmem [#allocation2], %s255
        %p257 = scmp.lt.s32.totalorder %s20, 1
        %s258 = scalar_select %p257, %s20, 1
        %s259 = smul.addr %s258, 8
        %s260 = scalar_lea.vmem %s0, %s259
        %p261 = scmp.lt.s32.totalorder %s20, 1
        %s262 = scalar_select %p261, %s20, 1
        %s263 = smul.addr %s262, 4
        %s264 = smul.addr %s263, 8
        %s265 = scalar_lea.vmem %s1, %s264
        %v267 = vld [vmem:[%s2] sm:$0xf]
        %v268 = vld [vmem:[%s260] sm:$0xff]
        %vm269 = vcmask 261120
        %v270 = vsel %vm269, %v268, 0.0
        %271 = vadd.xlane.f32.xlu0 %v270
        %v272 = vpop.xlane.xlu0 %271
        %v273 = vrcp.pop 32.0
        %v274 = vmul.f32 %v272, %v273
        %v275 = vsub.f32 %v268, %v274
        %v276 = vmul.f32 %v275, %v275
        %v277 = vsel %vm269, %v276, 0.0
        %278 = vadd.xlane.f32.xlu0 %v277
        %v279 = vpop.xlane.xlu0 %278
        %v280 = vmul.f32 %v279, %v273
        %v281 = vadd.f32 %v280, 1e-05
        %v282 = vrsqrt.pop %v281
        %v283 = vmul.f32 %v275, %v282
        %v284 = vlaneseq
        %v285 = vshrl.u32 %v284, 7
        %v286 = vsub.s32 0, %v285
        %v287 = vrot.slane %v267, %v286
        %v288 = vmul.f32 %v283, %v287
        %v289 = vlaneseq
        %v290 = vshrl.u32 %v289, 7
        %v291 = vsub.s32 1, %v290
        %v292 = vrot.slane %v267, %v291
        %v293 = vadd.f32 %v288, %v292
        %v294 = vld [vmem:[%s265] sm:$0xff]
        %v295 = vld [vmem:[%s265 + $0x8] sm:$0xff]
        %v296 = vld [vmem:[%s265 + $0x10] sm:$0xff]
        %v297 = vld [vmem:[%s265 + $0x18] sm:$0xff]
        %v298 = vld [vmem:[%s3] sm:$0xf]
        %v299 = vld [vmem:[%s3 + $0x4] sm:$0xf]
        %v300 = vld [vmem:[%s3 + $0x8] sm:$0xf]
        %v301 = vld [vmem:[%s3 + $0xc] sm:$0xf]
        %v302 = vld [vmem:[%s3 + $0x10] sm:$0xf]
        %v303 = vld [vmem:[%s3 + $0x14] sm:$0xf]
        %v304 = vld [vmem:[%s3 + $0x18] sm:$0xf]
        %v305 = vld [vmem:[%s3 + $0x1c] sm:$0xf]
        %v306 = vld [vmem:[%s3 + $0x20] sm:$0xf]
        %v307 = vld [vmem:[%s3 + $0x24] sm:$0xf]
        %v308 = vld [vmem:[%s3 + $0x28] sm:$0xf]
        %v309 = vld [vmem:[%s3 + $0x2c] sm:$0xf]
        %v310 = vld [vmem:[%s4] sm:$0xff]
        %v311 = vpack.c.bf16 %v293, %v293
        %v312 = vlaneseq
        %v313 = vshrl.u32 %v312, 7
        %v314 = vsub.s32 0, %v313
        %v315 = vrot.slane %v310, %v314
        %v328 = vunpack.c.l.b16 %v298
        %v329 = vunpack.c.l.b16 %v299
        %v330 = vunpack.c.l.b16 %v300
        %v331 = vunpack.c.l.b16 %v301
        %v332 = vunpack.c.l.b16 %v302
        %v333 = vunpack.c.l.b16 %v303
        %v334 = vunpack.c.l.b16 %v304
        %v335 = vunpack.c.l.b16 %v305
        %v336 = vunpack.c.l.b16 %v306
        %v337 = vunpack.c.l.b16 %v307
        %v338 = vunpack.c.l.b16 %v308
        %v339 = vunpack.c.l.b16 %v309
        %v340 = vpack.c.b16 %v329, %v328
        %v341 = vpack.c.b16 %v331, %v330
        %v342 = vpack.c.b16 %v333, %v332
        %v343 = vpack.c.b16 %v335, %v334
        %v344 = vpack.c.b16 %v337, %v336
        %v345 = vpack.c.b16 %v339, %v338
        %v347 = vsel %vm269, %v311, 0
        %v350 = vsel %vm269, %v340, 0
        %v353 = vsel %vm269, %v341, 0
        %v356 = vsel %vm269, %v342, 0
        %v359 = vsel %vm269, %v343, 0
        %v362 = vsel %vm269, %v344, 0
        %v365 = vsel %vm269, %v345, 0
        %367 = vmatprep.subr.bf16.mxu0 0
        %368 = vmatpush1.bf16.xpose.msra.mxu0 0
        %369 = vmatprep.subr.bf16.mxu0 0
        %370 = vmatpush1.bf16.xpose.msra.mxu0 0
        %371 = vmatprep.subr.bf16.mxu0 0
        %372 = vmatpush1.bf16.xpose.msra.mxu0 %v365
        %373 = vmatprep.subr.bf16.mxu0 0
        %374 = vmatpush1.bf16.xpose.msra.mxu0 %v362
        %375 = vmatprep.subr.bf16.mxu0 0
        %376 = vmatpush1.bf16.xpose.msra.mxu0 %v359
        %377 = vmatprep.subr.bf16.mxu0 0
        %378 = vmatpush1.bf16.xpose.msra.mxu0 %v356
        %379 = vmatprep.subr.bf16.mxu0 0
        %380 = vmatpush1.bf16.xpose.msra.mxu0 %v353
        %381 = vmatprep.subr.bf16.mxu0 0
        %382 = vmatpush1.bf16.xpose.msra.mxu0 %v350
        %383 = vmatprep.subr.bf16.mxu0 0
        %384 = vmatpush2.bf16.xpose.msra.mxu0 0
        %385 = vmatprep.subr.bf16.mxu0 0
        %386 = vmatpush2.bf16.xpose.msra.mxu0 0
        %387 = vmatprep.subr.bf16.mxu0 0
        %388 = vmatpush2.bf16.xpose.msra.mxu0 0
        %389 = vmatprep.subr.bf16.mxu0 0
        %390 = vmatpush2.bf16.xpose.msra.mxu0 0
        %391 = vmatprep.subr.bf16.mxu0 0
        %392 = vmatpush2.bf16.xpose.msra.mxu0 0
        %393 = vmatprep.subr.bf16.mxu0 0
        %394 = vmatpush2.bf16.xpose.msra.mxu0 0
        %395 = vmatprep.subr.bf16.mxu0 0
        %396 = vmatpush2.bf16.xpose.msra.mxu0 0
        %397 = vmatprep.subr.bf16.mxu0 0
        %398 = vmatpush2.bf16.xpose.msra.mxu0 0
        %399 = vmatprep.mubr.bf16.mxu0 0
        %400 = vmatmul.mubr.bf16.gmra.mxu0 %v347
        %v401 = vpop.f32.mrf.mxu0
        %v402 = vadd.f32 %v315, %v401
        %v403 = vpop.f32.mrf.mxu0
        %v404 = vpop.f32.mrf.mxu0
        %v405 = vpop.f32.mrf.mxu0
        %406 = vdwg.mxu0
        %408 = vrot.lane.b32.xlu0 %v402, 120
        %v409 = vpop.permute.xlu0 %408
        %411 = vrot.lane.b32.xlu0 %v402, 112
        %v412 = vpop.permute.xlu0 %411
        %414 = vrot.lane.b32.xlu0 %v402, 104
        %v415 = vpop.permute.xlu0 %414
        %v417 = vpack.c.bf16 %v409, %v402
        %v418 = vpack.c.bf16 %v415, %v412
        %421 = vrot.lane.b32.xlu0 %v417, 96
        %v422 = vpop.permute.xlu0 %421
        %423 = vrot.lane.b32.xlu0 %v418, 96
        %v424 = vpop.permute.xlu0 %423
        %vm425 = vcmask 64512
        %v427 = vsel %vm425, %v417, 0
        %v430 = vsel %vm425, %v418, 0
        %v433 = vsel %vm425, %v422, 0
        %v436 = vsel %vm425, %v424, 0
        %438 = vmatprep.subr.bf16.mxu0 0
        %439 = vmatpush1.bf16.xpose.msra.mxu0 0
        %440 = vmatprep.subr.bf16.mxu0 0
        %441 = vmatpush1.bf16.xpose.msra.mxu0 0
        %442 = vmatprep.subr.bf16.mxu0 0
        %443 = vmatpush1.bf16.xpose.msra.mxu0 0
        %444 = vmatprep.subr.bf16.mxu0 0
        %445 = vmatpush1.bf16.xpose.msra.mxu0 0
        %446 = vmatprep.subr.bf16.mxu0 0
        %447 = vmatpush1.bf16.xpose.msra.mxu0 0
        %448 = vmatprep.subr.bf16.mxu0 0
        %449 = vmatpush1.bf16.xpose.msra.mxu0 0
        %450 = vmatprep.subr.bf16.mxu0 0
        %451 = vmatpush1.bf16.xpose.msra.mxu0 %v436
        %452 = vmatprep.subr.bf16.mxu0 0
        %453 = vmatpush1.bf16.xpose.msra.mxu0 %v433
        %454 = vmatprep.subr.bf16.mxu0 0
        %455 = vmatpush2.bf16.xpose.msra.mxu0 0
        %456 = vmatprep.subr.bf16.mxu0 0
        %457 = vmatpush2.bf16.xpose.msra.mxu0 0
        %458 = vmatprep.subr.bf16.mxu0 0
        %459 = vmatpush2.bf16.xpose.msra.mxu0 0
        %460 = vmatprep.subr.bf16.mxu0 0
        %461 = vmatpush2.bf16.xpose.msra.mxu0 0
        %462 = vmatprep.subr.bf16.mxu0 0
        %463 = vmatpush2.bf16.xpose.msra.mxu0 0
        %464 = vmatprep.subr.bf16.mxu0 0
        %465 = vmatpush2.bf16.xpose.msra.mxu0 0
        %466 = vmatprep.subr.bf16.mxu0 0
        %467 = vmatpush2.bf16.xpose.msra.mxu0 0
        %468 = vmatprep.subr.bf16.mxu0 0
        %469 = vmatpush2.bf16.xpose.msra.mxu0 0
        %470 = vmatprep.mubr.bf16.mxu0 0
        %471 = vmatmul.mubr.bf16.gmra.mxu0 %v427
        %v472 = vpop.f32.mrf.mxu0
        %v473 = vadd.f32 0.0, %v472
        %v474 = vpop.f32.mrf.mxu0
        %v475 = vpop.f32.mrf.mxu0
        %v476 = vadd.f32 0.0, %v475
        %v477 = vpop.f32.mrf.mxu0
        %478 = vmatprep.mubr.bf16.mxu0 0
        %479 = vmatmul.mubr.bf16.gmra.mxu0 %v430
        %v480 = vpop.f32.mrf.mxu0
        %v481 = vadd.f32 0.0, %v480
        %v482 = vpop.f32.mrf.mxu0
        %v483 = vpop.f32.mrf.mxu0
        %v484 = vadd.f32 0.0, %v483
        %v485 = vpop.f32.mrf.mxu0
        %486 = vdwg.mxu0
        %v487 = vmul.f32 %v473, 0.35355338
        %v488 = vmul.f32 %v476, 0.35355338
        %v489 = vmul.f32 %v481, 0.35355338
        %v490 = vmul.f32 %v484, 0.35355338
        %v491 = vadd.f32 %v487, %v294
        %v492 = vadd.f32 %v488, %v295
        %v493 = vadd.f32 %v489, %v296
        %v494 = vadd.f32 %v490, %v297
        %v495 = vsel %vm269, %v491, -inf
        %496 = vmax.xlane.f32.xlu0 %v495
        %v497 = vpop.xlane.xlu0 %496
        %v498 = vsel %vm269, %v492, -inf
        %499 = vmax.xlane.f32.xlu0 %v498
        %v500 = vpop.xlane.xlu0 %499
        %v501 = vsel %vm269, %v493, -inf
        %502 = vmax.xlane.f32.xlu0 %v501
        %v503 = vpop.xlane.xlu0 %502
        %v504 = vsel %vm269, %v494, -inf
        %505 = vmax.xlane.f32.xlu0 %v504
        %v506 = vpop.xlane.xlu0 %505
        %v507 = vsub.f32 %v491, %v497
        %v508 = vsub.f32 %v492, %v500
        %v509 = vsub.f32 %v493, %v503
        %v510 = vsub.f32 %v494, %v506
        %v511 = vmul.f32 %v507, 1.442695
        %v512 = vpow.pop %v511
        %v513 = vmul.f32 %v508, 1.442695
        %v514 = vpow.pop %v513
        %v515 = vmul.f32 %v509, 1.442695
        %v516 = vpow.pop %v515
        %v517 = vmul.f32 %v510, 1.442695
        %v518 = vpow.pop %v517
        %v519 = vsel %vm269, %v512, 0.0
        %520 = vadd.xlane.f32.xlu0 %v519
        %v521 = vpop.xlane.xlu0 %520
        %v522 = vsel %vm269, %v514, 0.0
        %523 = vadd.xlane.f32.xlu0 %v522
        %v524 = vpop.xlane.xlu0 %523
        %v525 = vsel %vm269, %v516, 0.0
        %526 = vadd.xlane.f32.xlu0 %v525
        %v527 = vpop.xlane.xlu0 %526
        %v528 = vsel %vm269, %v518, 0.0
        %529 = vadd.xlane.f32.xlu0 %v528
        %v530 = vpop.xlane.xlu0 %529
        %v531 = vrcp.pop %v521
        %v532 = vmul.f32 %v512, %v531
        %v533 = vrcp.pop %v524
        %v534 = vmul.f32 %v514, %v533
        %v535 = vrcp.pop %v527
        %v536 = vmul.f32 %v516, %v535
        %v537 = vrcp.pop %v530
        %v538 = vmul.f32 %v518, %v537
        %v539 = vpack.c.bf16 %v534, %v532
        %v540 = vpack.c.bf16 %v538, %v536
        %541 = vrot.lane.b32.xlu0 %v417, 64
        %v542 = vpop.permute.xlu0 %541
        %543 = vrot.lane.b32.xlu0 %v418, 64
        %v544 = vpop.permute.xlu0 %543
        %v548 = vsel %vm269, %v539, 0
        %v551 = vsel %vm269, %v540, 0
        %553 = vmatprep.subr.bf16.mxu0 0
        %554 = vmatpush1.bf16.msra.mxu0 0
        %555 = vmatprep.subr.bf16.mxu0 0
        %556 = vmatpush1.bf16.msra.mxu0 0
        %557 = vmatprep.subr.bf16.mxu0 0
        %558 = vmatpush1.bf16.msra.mxu0 0
        %559 = vmatprep.subr.bf16.mxu0 0
        %560 = vmatpush1.bf16.msra.mxu0 0
        %561 = vmatprep.subr.bf16.mxu0 0
        %562 = vmatpush1.bf16.msra.mxu0 0
        %563 = vmatprep.subr.bf16.mxu0 0
        %564 = vmatpush1.bf16.msra.mxu0 0
        %565 = vmatprep.subr.bf16.mxu0 0
        %566 = vmatpush1.bf16.msra.mxu0 %v544
        %567 = vmatprep.subr.bf16.mxu0 0
        %568 = vmatpush1.bf16.msra.mxu0 %v542
        %569 = vmatprep.subr.bf16.mxu0 0
        %570 = vmatpush2.bf16.msra.mxu0 0
        %571 = vmatprep.subr.bf16.mxu0 0
        %572 = vmatpush2.bf16.msra.mxu0 0
        %573 = vmatprep.subr.bf16.mxu0 0
        %574 = vmatpush2.bf16.msra.mxu0 0
        %575 = vmatprep.subr.bf16.mxu0 0
        %576 = vmatpush2.bf16.msra.mxu0 0
        %577 = vmatprep.subr.bf16.mxu0 0
        %578 = vmatpush2.bf16.msra.mxu0 0
        %579 = vmatprep.subr.bf16.mxu0 0
        %580 = vmatpush2.bf16.msra.mxu0 0
        %581 = vmatprep.subr.bf16.mxu0 0
        %582 = vmatpush2.bf16.msra.mxu0 0
        %583 = vmatprep.subr.bf16.mxu0 0
        %584 = vmatpush2.bf16.msra.mxu0 0
        %585 = vmatprep.mubr.bf16.mxu0 0
        %586 = vmatmul.mubr.bf16.gmra.mxu0 %v548
        %v587 = vpop.f32.mrf.mxu0
        %v588 = vadd.f32 0.0, %v587
        %v589 = vpop.f32.mrf.mxu0
        %v590 = vpop.f32.mrf.mxu0
        %v591 = vadd.f32 0.0, %v590
        %v592 = vpop.f32.mrf.mxu0
        %593 = vmatprep.mubr.bf16.mxu0 0
        %594 = vmatmul.mubr.bf16.gmra.mxu0 %v551
        %v595 = vpop.f32.mrf.mxu0
        %v596 = vadd.f32 0.0, %v595
        %v597 = vpop.f32.mrf.mxu0
        %v598 = vpop.f32.mrf.mxu0
        %v599 = vadd.f32 0.0, %v598
        %v600 = vpop.f32.mrf.mxu0
        %601 = vdwg.mxu0
        %603 = vrot.lane.b32.xlu0 %v591, 8
        %v604 = vpop.permute.xlu0 %603
        %607 = vrot.lane.b32.xlu0 %v596, 16
        %v608 = vpop.permute.xlu0 %607
        %611 = vrot.lane.b32.xlu0 %v599, 24
        %v612 = vpop.permute.xlu0 %611
        %v614 = vsel %vm425, %v588, %v604
        %vm615 = vcmask 130048
        %v616 = vsel %vm615, %v614, %v608
        %vm617 = vcmask 195584
        %v618 = vsel %vm617, %v616, %v612
        %v619 = vpack.c.bf16 %v618, %v618
        %v620 = vlaneseq
        %v621 = vshrl.u32 %v620, 7
        %v622 = vsub.s32 1, %v621
        %v623 = vrot.slane %v310, %v622
        %624 = vrot.lane.b32.xlu0 %v340, 96
        %v625 = vpop.permute.xlu0 %624
        %626 = vrot.lane.b32.xlu0 %v341, 96
        %v627 = vpop.permute.xlu0 %626
        %v629 = vsel %vm269, %v619, 0
        %v632 = vsel %vm269, %v625, 0
        %v635 = vsel %vm269, %v627, 0
        %637 = vmatprep.subr.bf16.mxu0 0
        %638 = vmatpush1.bf16.xpose.msra.mxu0 0
        %639 = vmatprep.subr.bf16.mxu0 0
        %640 = vmatpush1.bf16.xpose.msra.mxu0 0
        %641 = vmatprep.subr.bf16.mxu0 0
        %642 = vmatpush1.bf16.xpose.msra.mxu0 0
        %643 = vmatprep.subr.bf16.mxu0 0
        %644 = vmatpush1.bf16.xpose.msra.mxu0 0
        %645 = vmatprep.subr.bf16.mxu0 0
        %646 = vmatpush1.bf16.xpose.msra.mxu0 0
        %647 = vmatprep.subr.bf16.mxu0 0
        %648 = vmatpush1.bf16.xpose.msra.mxu0 0
        %649 = vmatprep.subr.bf16.mxu0 0
        %650 = vmatpush1.bf16.xpose.msra.mxu0 %v635
        %651 = vmatprep.subr.bf16.mxu0 0
        %652 = vmatpush1.bf16.xpose.msra.mxu0 %v632
        %653 = vmatprep.subr.bf16.mxu0 0
        %654 = vmatpush2.bf16.xpose.msra.mxu0 0
        %655 = vmatprep.subr.bf16.mxu0 0
        %656 = vmatpush2.bf16.xpose.msra.mxu0 0
        %657 = vmatprep.subr.bf16.mxu0 0
        %658 = vmatpush2.bf16.xpose.msra.mxu0 0
        %659 = vmatprep.subr.bf16.mxu0 0
        %660 = vmatpush2.bf16.xpose.msra.mxu0 0
        %661 = vmatprep.subr.bf16.mxu0 0
        %662 = vmatpush2.bf16.xpose.msra.mxu0 0
        %663 = vmatprep.subr.bf16.mxu0 0
        %664 = vmatpush2.bf16.xpose.msra.mxu0 0
        %665 = vmatprep.subr.bf16.mxu0 0
        %666 = vmatpush2.bf16.xpose.msra.mxu0 0
        %667 = vmatprep.subr.bf16.mxu0 0
        %668 = vmatpush2.bf16.xpose.msra.mxu0 0
        %669 = vmatprep.mubr.bf16.mxu0 0
        %670 = vmatmul.mubr.bf16.gmra.mxu0 %v629
        %v671 = vpop.f32.mrf.mxu0
        %v672 = vadd.f32 %v623, %v671
        %v673 = vpop.f32.mrf.mxu0
        %v674 = vpop.f32.mrf.mxu0
        %v675 = vpop.f32.mrf.mxu0
        %676 = vdwg.mxu0
        %v677 = vadd.f32 %v672, %v293
        %v678 = vsel %vm269, %v677, 0.0
        %679 = vadd.xlane.f32.xlu0 %v678
        %v680 = vpop.xlane.xlu0 %679
        %v681 = vmul.f32 %v680, %v273
        %v682 = vsub.f32 %v677, %v681
        %v683 = vmul.f32 %v682, %v682
        %v684 = vsel %vm269, %v683, 0.0
        %685 = vadd.xlane.f32.xlu0 %v684
        %v686 = vpop.xlane.xlu0 %685
        %v687 = vmul.f32 %v686, %v273
        %v688 = vadd.f32 %v687, 1e-05
        %v689 = vrsqrt.pop %v688
        %v690 = vmul.f32 %v682, %v689
        %v691 = vlaneseq
        %v692 = vshrl.u32 %v691, 7
        %v693 = vsub.s32 2, %v692
        %v694 = vrot.slane %v310, %v693
        %v695 = vmul.f32 %v690, %v694
        %v696 = vlaneseq
        %v697 = vshrl.u32 %v696, 7
        %v698 = vsub.s32 3, %v697
        %v699 = vrot.slane %v310, %v698
        %v700 = vadd.f32 %v695, %v699
        %v701 = vpack.c.bf16 %v700, %v700
        %v702 = vlaneseq
        %v703 = vshrl.u32 %v702, 7
        %v704 = vsub.s32 4, %v703
        %v705 = vrot.slane %v310, %v704
        %706 = vrot.lane.b32.xlu0 %v340, 64
        %v707 = vpop.permute.xlu0 %706
        %708 = vrot.lane.b32.xlu0 %v341, 64
        %v709 = vpop.permute.xlu0 %708
        %710 = vrot.lane.b32.xlu0 %v342, 64
        %v711 = vpop.permute.xlu0 %710
        %712 = vrot.lane.b32.xlu0 %v343, 64
        %v713 = vpop.permute.xlu0 %712
        %v715 = vsel %vm269, %v701, 0
        %v718 = vsel %vm269, %v707, 0
        %v721 = vsel %vm269, %v709, 0
        %v724 = vsel %vm269, %v711, 0
        %v727 = vsel %vm269, %v713, 0
        %729 = vmatprep.subr.bf16.mxu0 0
        %730 = vmatpush1.bf16.xpose.msra.mxu0 0
        %731 = vmatprep.subr.bf16.mxu0 0
        %732 = vmatpush1.bf16.xpose.msra.mxu0 0
        %733 = vmatprep.subr.bf16.mxu0 0
        %734 = vmatpush1.bf16.xpose.msra.mxu0 0
        %735 = vmatprep.subr.bf16.mxu0 0
        %736 = vmatpush1.bf16.xpose.msra.mxu0 0
        %737 = vmatprep.subr.bf16.mxu0 0
        %738 = vmatpush1.bf16.xpose.msra.mxu0 %v727
        %739 = vmatprep.subr.bf16.mxu0 0
        %740 = vmatpush1.bf16.xpose.msra.mxu0 %v724
        %741 = vmatprep.subr.bf16.mxu0 0
        %742 = vmatpush1.bf16.xpose.msra.mxu0 %v721
        %743 = vmatprep.subr.bf16.mxu0 0
        %744 = vmatpush1.bf16.xpose.msra.mxu0 %v718
        %745 = vmatprep.subr.bf16.mxu0 0
        %746 = vmatpush2.bf16.xpose.msra.mxu0 0
        %747 = vmatprep.subr.bf16.mxu0 0
        %748 = vmatpush2.bf16.xpose.msra.mxu0 0
        %749 = vmatprep.subr.bf16.mxu0 0
        %750 = vmatpush2.bf16.xpose.msra.mxu0 0
        %751 = vmatprep.subr.bf16.mxu0 0
        %752 = vmatpush2.bf16.xpose.msra.mxu0 0
        %753 = vmatprep.subr.bf16.mxu0 0
        %754 = vmatpush2.bf16.xpose.msra.mxu0 0
        %755 = vmatprep.subr.bf16.mxu0 0
        %756 = vmatpush2.bf16.xpose.msra.mxu0 0
        %757 = vmatprep.subr.bf16.mxu0 0
        %758 = vmatpush2.bf16.xpose.msra.mxu0 0
        %759 = vmatprep.subr.bf16.mxu0 0
        %760 = vmatpush2.bf16.xpose.msra.mxu0 0
        %761 = vmatprep.mubr.bf16.mxu0 0
        %762 = vmatmul.mubr.bf16.gmra.mxu0 %v715
        %v763 = vpop.f32.mrf.mxu0
        %v764 = vadd.f32 %v705, %v763
        %v765 = vpop.f32.mrf.mxu0
        %v766 = vpop.f32.mrf.mxu0
        %v767 = vpop.f32.mrf.mxu0
        %768 = vdwg.mxu0
        %v769 = vmul.f32 %v764, 0.5
        %v770 = vmul.f32 %v764, 0.70710677
        %v771 = verf.f32.pop %v770
        %v772 = vadd.f32 %v771, 1.0
        %v773 = vmul.f32 %v769, %v772
        %v774 = vpack.c.bf16 %v773, %v773
        %v775 = vlaneseq
        %v776 = vshrl.u32 %v775, 7
        %v777 = vsub.s32 5, %v776
        %v778 = vrot.slane %v310, %v777
        %779 = vrot.lane.b32.xlu0 %v340, 32
        %v780 = vpop.permute.xlu0 %779
        %781 = vrot.lane.b32.xlu0 %v341, 32
        %v782 = vpop.permute.xlu0 %781
        %783 = vrot.lane.b32.xlu0 %v342, 32
        %v784 = vpop.permute.xlu0 %783
        %785 = vrot.lane.b32.xlu0 %v343, 32
        %v786 = vpop.permute.xlu0 %785
        %vm791 = vcmask 523264
        %v793 = vsel %vm791, %v774, 0
        %795 = vmatprep.subr.bf16.mxu0 0
        %796 = vmatpush1.bf16.msra.mxu0 0
        %797 = vmatprep.subr.bf16.mxu0 0
        %798 = vmatpush1.bf16.msra.mxu0 0
        %799 = vmatprep.subr.bf16.mxu0 0
        %800 = vmatpush1.bf16.msra.mxu0 0
        %801 = vmatprep.subr.bf16.mxu0 0
        %802 = vmatpush1.bf16.msra.mxu0 0
        %803 = vmatprep.subr.bf16.mxu0 0
        %804 = vmatpush1.bf16.msra.mxu0 %v786
        %805 = vmatprep.subr.bf16.mxu0 0
        %806 = vmatpush1.bf16.msra.mxu0 %v784
        %807 = vmatprep.subr.bf16.mxu0 0
        %808 = vmatpush1.bf16.msra.mxu0 %v782
        %809 = vmatprep.subr.bf16.mxu0 0
        %810 = vmatpush1.bf16.msra.mxu0 %v780
        %811 = vmatprep.subr.bf16.mxu0 0
        %812 = vmatpush2.bf16.msra.mxu0 0
        %813 = vmatprep.subr.bf16.mxu0 0
        %814 = vmatpush2.bf16.msra.mxu0 0
        %815 = vmatprep.subr.bf16.mxu0 0
        %816 = vmatpush2.bf16.msra.mxu0 0
        %817 = vmatprep.subr.bf16.mxu0 0
        %818 = vmatpush2.bf16.msra.mxu0 0
        %819 = vmatprep.subr.bf16.mxu0 0
        %820 = vmatpush2.bf16.msra.mxu0 0
        %821 = vmatprep.subr.bf16.mxu0 0
        %822 = vmatpush2.bf16.msra.mxu0 0
        %823 = vmatprep.subr.bf16.mxu0 0
        %824 = vmatpush2.bf16.msra.mxu0 0
        %825 = vmatprep.subr.bf16.mxu0 0
        %826 = vmatpush2.bf16.msra.mxu0 0
        %827 = vmatprep.mubr.bf16.mxu0 0
        %828 = vmatmul.mubr.bf16.gmra.mxu0 %v793
        %v829 = vpop.f32.mrf.mxu0
        %v830 = vadd.f32 %v778, %v829
        %v831 = vpop.f32.mrf.mxu0
        %v832 = vpop.f32.mrf.mxu0
        %v833 = vpop.f32.mrf.mxu0
        %834 = vdwg.mxu0
        %v835 = vadd.f32 %v830, %v700
        %v836 = vsel %vm269, %v835, 0.0
        %837 = vadd.xlane.f32.xlu0 %v836
        %v838 = vpop.xlane.xlu0 %837
        %v839 = vmul.f32 %v838, %v273
        %v840 = vsub.f32 %v835, %v839
        %v841 = vmul.f32 %v840, %v840
        %v842 = vsel %vm269, %v841, 0.0
        %843 = vadd.xlane.f32.xlu0 %v842
        %v844 = vpop.xlane.xlu0 %843
        %v845 = vmul.f32 %v844, %v273
        %v846 = vadd.f32 %v845, 1e-05
        %v847 = vrsqrt.pop %v846
        %v848 = vmul.f32 %v840, %v847
        %v849 = vlaneseq
        %v850 = vshrl.u32 %v849, 7
        %v851 = vsub.s32 6, %v850
        %v852 = vrot.slane %v310, %v851
        %v853 = vmul.f32 %v848, %v852
        %v854 = vlaneseq
        %v855 = vshrl.u32 %v854, 7
        %v856 = vsub.s32 7, %v855
        %v857 = vrot.slane %v310, %v856
        %v858 = vadd.f32 %v853, %v857
        %s859 = scalar_lea.vmem %s3, 48
        %v860 = vld [vmem:[%s859] sm:$0xf]
        %v861 = vld [vmem:[%s859 + $0x4] sm:$0xf]
        %v862 = vld [vmem:[%s859 + $0x8] sm:$0xf]
        %v863 = vld [vmem:[%s859 + $0xc] sm:$0xf]
        %v864 = vld [vmem:[%s859 + $0x10] sm:$0xf]
        %v865 = vld [vmem:[%s859 + $0x14] sm:$0xf]
        %v866 = vld [vmem:[%s859 + $0x18] sm:$0xf]
        %v867 = vld [vmem:[%s859 + $0x1c] sm:$0xf]
        %v868 = vld [vmem:[%s859 + $0x20] sm:$0xf]
        %v869 = vld [vmem:[%s859 + $0x24] sm:$0xf]
        %v870 = vld [vmem:[%s859 + $0x28] sm:$0xf]
        %v871 = vld [vmem:[%s859 + $0x2c] sm:$0xf]
        %s872 = scalar_lea.vmem %s4, 8
        %v873 = vld [vmem:[%s872] sm:$0xff]
        %v874 = vpack.c.bf16 %v858, %v858
        %v875 = vlaneseq
        %v876 = vshrl.u32 %v875, 7
        %v877 = vsub.s32 0, %v876
        %v878 = vrot.slane %v873, %v877
        %v891 = vunpack.c.l.b16 %v860
        %v892 = vunpack.c.l.b16 %v861
        %v893 = vunpack.c.l.b16 %v862
        %v894 = vunpack.c.l.b16 %v863
        %v895 = vunpack.c.l.b16 %v864
        %v896 = vunpack.c.l.b16 %v865
        %v897 = vunpack.c.l.b16 %v866
        %v898 = vunpack.c.l.b16 %v867
        %v899 = vunpack.c.l.b16 %v868
        %v900 = vunpack.c.l.b16 %v869
        %v901 = vunpack.c.l.b16 %v870
        %v902 = vunpack.c.l.b16 %v871
        %v903 = vpack.c.b16 %v892, %v891
        %v904 = vpack.c.b16 %v894, %v893
        %v905 = vpack.c.b16 %v896, %v895
        %v906 = vpack.c.b16 %v898, %v897
        %v907 = vpack.c.b16 %v900, %v899
        %v908 = vpack.c.b16 %v902, %v901
        %v910 = vsel %vm269, %v874, 0
        %v913 = vsel %vm269, %v903, 0
        %v916 = vsel %vm269, %v904, 0
        %v919 = vsel %vm269, %v905, 0
        %v922 = vsel %vm269, %v906, 0
        %v925 = vsel %vm269, %v907, 0
        %v928 = vsel %vm269, %v908, 0
        %930 = vmatprep.subr.bf16.mxu0 0
        %931 = vmatpush1.bf16.xpose.msra.mxu0 0
        %932 = vmatprep.subr.bf16.mxu0 0
        %933 = vmatpush1.bf16.xpose.msra.mxu0 0
        %934 = vmatprep.subr.bf16.mxu0 0
        %935 = vmatpush1.bf16.xpose.msra.mxu0 %v928
        %936 = vmatprep.subr.bf16.mxu0 0
        %937 = vmatpush1.bf16.xpose.msra.mxu0 %v925
        %938 = vmatprep.subr.bf16.mxu0 0
        %939 = vmatpush1.bf16.xpose.msra.mxu0 %v922
        %940 = vmatprep.subr.bf16.mxu0 0
        %941 = vmatpush1.bf16.xpose.msra.mxu0 %v919
        %942 = vmatprep.subr.bf16.mxu0 0
        %943 = vmatpush1.bf16.xpose.msra.mxu0 %v916
        %944 = vmatprep.subr.bf16.mxu0 0
        %945 = vmatpush1.bf16.xpose.msra.mxu0 %v913
        %946 = vmatprep.subr.bf16.mxu0 0
        %947 = vmatpush2.bf16.xpose.msra.mxu0 0
        %948 = vmatprep.subr.bf16.mxu0 0
        %949 = vmatpush2.bf16.xpose.msra.mxu0 0
        %950 = vmatprep.subr.bf16.mxu0 0
        %951 = vmatpush2.bf16.xpose.msra.mxu0 0
        %952 = vmatprep.subr.bf16.mxu0 0
        %953 = vmatpush2.bf16.xpose.msra.mxu0 0
        %954 = vmatprep.subr.bf16.mxu0 0
        %955 = vmatpush2.bf16.xpose.msra.mxu0 0
        %956 = vmatprep.subr.bf16.mxu0 0
        %957 = vmatpush2.bf16.xpose.msra.mxu0 0
        %958 = vmatprep.subr.bf16.mxu0 0
        %959 = vmatpush2.bf16.xpose.msra.mxu0 0
        %960 = vmatprep.subr.bf16.mxu0 0
        %961 = vmatpush2.bf16.xpose.msra.mxu0 0
        %962 = vmatprep.mubr.bf16.mxu0 0
        %963 = vmatmul.mubr.bf16.gmra.mxu0 %v910
        %v964 = vpop.f32.mrf.mxu0
        %v965 = vadd.f32 %v878, %v964
        %v966 = vpop.f32.mrf.mxu0
        %v967 = vpop.f32.mrf.mxu0
        %v968 = vpop.f32.mrf.mxu0
        %969 = vdwg.mxu0
        %971 = vrot.lane.b32.xlu0 %v965, 120
        %v972 = vpop.permute.xlu0 %971
        %974 = vrot.lane.b32.xlu0 %v965, 112
        %v975 = vpop.permute.xlu0 %974
        %977 = vrot.lane.b32.xlu0 %v965, 104
        %v978 = vpop.permute.xlu0 %977
        %v980 = vpack.c.bf16 %v972, %v965
        %v981 = vpack.c.bf16 %v978, %v975
        %984 = vrot.lane.b32.xlu0 %v980, 96
        %v985 = vpop.permute.xlu0 %984
        %986 = vrot.lane.b32.xlu0 %v981, 96
        %v987 = vpop.permute.xlu0 %986
        %v989 = vsel %vm425, %v980, 0
        %v992 = vsel %vm425, %v981, 0
        %v995 = vsel %vm425, %v985, 0
        %v998 = vsel %vm425, %v987, 0
        %1000 = vmatprep.subr.bf16.mxu0 0
        %1001 = vmatpush1.bf16.xpose.msra.mxu0 0
        %1002 = vmatprep.subr.bf16.mxu0 0
        %1003 = vmatpush1.bf16.xpose.msra.mxu0 0
        %1004 = vmatprep.subr.bf16.mxu0 0
        %1005 = vmatpush1.bf16.xpose.msra.mxu0 0
        %1006 = vmatprep.subr.bf16.mxu0 0
        %1007 = vmatpush1.bf16.xpose.msra.mxu0 0
        %1008 = vmatprep.subr.bf16.mxu0 0
        %1009 = vmatpush1.bf16.xpose.msra.mxu0 0
        %1010 = vmatprep.subr.bf16.mxu0 0
        %1011 = vmatpush1.bf16.xpose.msra.mxu0 0
        %1012 = vmatprep.subr.bf16.mxu0 0
        %1013 = vmatpush1.bf16.xpose.msra.mxu0 %v998
        %1014 = vmatprep.subr.bf16.mxu0 0
        %1015 = vmatpush1.bf16.xpose.msra.mxu0 %v995
        %1016 = vmatprep.subr.bf16.mxu0 0
        %1017 = vmatpush2.bf16.xpose.msra.mxu0 0
        %1018 = vmatprep.subr.bf16.mxu0 0
        %1019 = vmatpush2.bf16.xpose.msra.mxu0 0
        %1020 = vmatprep.subr.bf16.mxu0 0
        %1021 = vmatpush2.bf16.xpose.msra.mxu0 0
        %1022 = vmatprep.subr.bf16.mxu0 0
        %1023 = vmatpush2.bf16.xpose.msra.mxu0 0
        %1024 = vmatprep.subr.bf16.mxu0 0
        %1025 = vmatpush2.bf16.xpose.msra.mxu0 0
        %1026 = vmatprep.subr.bf16.mxu0 0
        %1027 = vmatpush2.bf16.xpose.msra.mxu0 0
        %1028 = vmatprep.subr.bf16.mxu0 0
        %1029 = vmatpush2.bf16.xpose.msra.mxu0 0
        %1030 = vmatprep.subr.bf16.mxu0 0
        %1031 = vmatpush2.bf16.xpose.msra.mxu0 0
        %1032 = vmatprep.mubr.bf16.mxu0 0
        %1033 = vmatmul.mubr.bf16.gmra.mxu0 %v989
        %v1034 = vpop.f32.mrf.mxu0
        %v1035 = vadd.f32 0.0, %v1034
        %v1036 = vpop.f32.mrf.mxu0
        %v1037 = vpop.f32.mrf.mxu0
        %v1038 = vadd.f32 0.0, %v1037
        %v1039 = vpop.f32.mrf.mxu0
        %1040 = vmatprep.mubr.bf16.mxu0 0
        %1041 = vmatmul.mubr.bf16.gmra.mxu0 %v992
        %v1042 = vpop.f32.mrf.mxu0
        %v1043 = vadd.f32 0.0, %v1042
        %v1044 = vpop.f32.mrf.mxu0
        %v1045 = vpop.f32.mrf.mxu0
        %v1046 = vadd.f32 0.0, %v1045
        %v1047 = vpop.f32.mrf.mxu0
        %1048 = vdwg.mxu0
        %v1049 = vmul.f32 %v1035, 0.35355338
        %v1050 = vmul.f32 %v1038, 0.35355338
        %v1051 = vmul.f32 %v1043, 0.35355338
        %v1052 = vmul.f32 %v1046, 0.35355338
        %v1053 = vadd.f32 %v1049, %v294
        %v1054 = vadd.f32 %v1050, %v295
        %v1055 = vadd.f32 %v1051, %v296
        %v1056 = vadd.f32 %v1052, %v297
        %v1057 = vsel %vm269, %v1053, -inf
        %1058 = vmax.xlane.f32.xlu0 %v1057
        %v1059 = vpop.xlane.xlu0 %1058
        %v1060 = vsel %vm269, %v1054, -inf
        %1061 = vmax.xlane.f32.xlu0 %v1060
        %v1062 = vpop.xlane.xlu0 %1061
        %v1063 = vsel %vm269, %v1055, -inf
        %1064 = vmax.xlane.f32.xlu0 %v1063
        %v1065 = vpop.xlane.xlu0 %1064
        %v1066 = vsel %vm269, %v1056, -inf
        %1067 = vmax.xlane.f32.xlu0 %v1066
        %v1068 = vpop.xlane.xlu0 %1067
        %v1069 = vsub.f32 %v1053, %v1059
        %v1070 = vsub.f32 %v1054, %v1062
        %v1071 = vsub.f32 %v1055, %v1065
        %v1072 = vsub.f32 %v1056, %v1068
        %v1073 = vmul.f32 %v1069, 1.442695
        %v1074 = vpow.pop %v1073
        %v1075 = vmul.f32 %v1070, 1.442695
        %v1076 = vpow.pop %v1075
        %v1077 = vmul.f32 %v1071, 1.442695
        %v1078 = vpow.pop %v1077
        %v1079 = vmul.f32 %v1072, 1.442695
        %v1080 = vpow.pop %v1079
        %v1081 = vsel %vm269, %v1074, 0.0
        %1082 = vadd.xlane.f32.xlu0 %v1081
        %v1083 = vpop.xlane.xlu0 %1082
        %v1084 = vsel %vm269, %v1076, 0.0
        %1085 = vadd.xlane.f32.xlu0 %v1084
        %v1086 = vpop.xlane.xlu0 %1085
        %v1087 = vsel %vm269, %v1078, 0.0
        %1088 = vadd.xlane.f32.xlu0 %v1087
        %v1089 = vpop.xlane.xlu0 %1088
        %v1090 = vsel %vm269, %v1080, 0.0
        %1091 = vadd.xlane.f32.xlu0 %v1090
        %v1092 = vpop.xlane.xlu0 %1091
        %v1093 = vrcp.pop %v1083
        %v1094 = vmul.f32 %v1074, %v1093
        %v1095 = vrcp.pop %v1086
        %v1096 = vmul.f32 %v1076, %v1095
        %v1097 = vrcp.pop %v1089
        %v1098 = vmul.f32 %v1078, %v1097
        %v1099 = vrcp.pop %v1092
        %v1100 = vmul.f32 %v1080, %v1099
        %v1101 = vpack.c.bf16 %v1096, %v1094
        %v1102 = vpack.c.bf16 %v1100, %v1098
        %1103 = vrot.lane.b32.xlu0 %v980, 64
        %v1104 = vpop.permute.xlu0 %1103
        %1105 = vrot.lane.b32.xlu0 %v981, 64
        %v1106 = vpop.permute.xlu0 %1105
        %v1110 = vsel %vm269, %v1101, 0
        %v1113 = vsel %vm269, %v1102, 0
        %1115 = vmatprep.subr.bf16.mxu0 0
        %1116 = vmatpush1.bf16.msra.mxu0 0
        %1117 = vmatprep.subr.bf16.mxu0 0
        %1118 = vmatpush1.bf16.msra.mxu0 0
        %1119 = vmatprep.subr.bf16.mxu0 0
        %1120 = vmatpush1.bf16.msra.mxu0 0
        %1121 = vmatprep.subr.bf16.mxu0 0
        %1122 = vmatpush1.bf16.msra.mxu0 0
        %1123 = vmatprep.subr.bf16.mxu0 0
        %1124 = vmatpush1.bf16.msra.mxu0 0
        %1125 = vmatprep.subr.bf16.mxu0 0
        %1126 = vmatpush1.bf16.msra.mxu0 0
        %1127 = vmatprep.subr.bf16.mxu0 0
        %1128 = vmatpush1.bf16.msra.mxu0 %v1106
        %1129 = vmatprep.subr.bf16.mxu0 0
        %1130 = vmatpush1.bf16.msra.mxu0 %v1104
        %1131 = vmatprep.subr.bf16.mxu0 0
        %1132 = vmatpush2.bf16.msra.mxu0 0
        %1133 = vmatprep.subr.bf16.mxu0 0
        %1134 = vmatpush2.bf16.msra.mxu0 0
        %1135 = vmatprep.subr.bf16.mxu0 0
        %1136 = vmatpush2.bf16.msra.mxu0 0
        %1137 = vmatprep.subr.bf16.mxu0 0
        %1138 = vmatpush2.bf16.msra.mxu0 0
        %1139 = vmatprep.subr.bf16.mxu0 0
        %1140 = vmatpush2.bf16.msra.mxu0 0
        %1141 = vmatprep.subr.bf16.mxu0 0
        %1142 = vmatpush2.bf16.msra.mxu0 0
        %1143 = vmatprep.subr.bf16.mxu0 0
        %1144 = vmatpush2.bf16.msra.mxu0 0
        %1145 = vmatprep.subr.bf16.mxu0 0
        %1146 = vmatpush2.bf16.msra.mxu0 0
        %1147 = vmatprep.mubr.bf16.mxu0 0
        %1148 = vmatmul.mubr.bf16.gmra.mxu0 %v1110
        %v1149 = vpop.f32.mrf.mxu0
        %v1150 = vadd.f32 0.0, %v1149
        %v1151 = vpop.f32.mrf.mxu0
        %v1152 = vpop.f32.mrf.mxu0
        %v1153 = vadd.f32 0.0, %v1152
        %v1154 = vpop.f32.mrf.mxu0
        %1155 = vmatprep.mubr.bf16.mxu0 0
        %1156 = vmatmul.mubr.bf16.gmra.mxu0 %v1113
        %v1157 = vpop.f32.mrf.mxu0
        %v1158 = vadd.f32 0.0, %v1157
        %v1159 = vpop.f32.mrf.mxu0
        %v1160 = vpop.f32.mrf.mxu0
        %v1161 = vadd.f32 0.0, %v1160
        %v1162 = vpop.f32.mrf.mxu0
        %1163 = vdwg.mxu0
        %1165 = vrot.lane.b32.xlu0 %v1153, 8
        %v1166 = vpop.permute.xlu0 %1165
        %1169 = vrot.lane.b32.xlu0 %v1158, 16
        %v1170 = vpop.permute.xlu0 %1169
        %1173 = vrot.lane.b32.xlu0 %v1161, 24
        %v1174 = vpop.permute.xlu0 %1173
        %v1176 = vsel %vm425, %v1150, %v1166
        %v1177 = vsel %vm615, %v1176, %v1170
        %v1178 = vsel %vm617, %v1177, %v1174
        %v1179 = vpack.c.bf16 %v1178, %v1178
        %v1180 = vlaneseq
        %v1181 = vshrl.u32 %v1180, 7
        %v1182 = vsub.s32 1, %v1181
        %v1183 = vrot.slane %v873, %v1182
        %1184 = vrot.lane.b32.xlu0 %v903, 96
        %v1185 = vpop.permute.xlu0 %1184
        %1186 = vrot.lane.b32.xlu0 %v904, 96
        %v1187 = vpop.permute.xlu0 %1186
        %v1189 = vsel %vm269, %v1179, 0
        %v1192 = vsel %vm269, %v1185, 0
        %v1195 = vsel %vm269, %v1187, 0
        %1197 = vmatprep.subr.bf16.mxu0 0
        %1198 = vmatpush1.bf16.xpose.msra.mxu0 0
        %1199 = vmatprep.subr.bf16.mxu0 0
        %1200 = vmatpush1.bf16.xpose.msra.mxu0 0
        %1201 = vmatprep.subr.bf16.mxu0 0
        %1202 = vmatpush1.bf16.xpose.msra.mxu0 0
        %1203 = vmatprep.subr.bf16.mxu0 0
        %1204 = vmatpush1.bf16.xpose.msra.mxu0 0
        %1205 = vmatprep.subr.bf16.mxu0 0
        %1206 = vmatpush1.bf16.xpose.msra.mxu0 0
        %1207 = vmatprep.subr.bf16.mxu0 0
        %1208 = vmatpush1.bf16.xpose.msra.mxu0 0
        %1209 = vmatprep.subr.bf16.mxu0 0
        %1210 = vmatpush1.bf16.xpose.msra.mxu0 %v1195
        %1211 = vmatprep.subr.bf16.mxu0 0
        %1212 = vmatpush1.bf16.xpose.msra.mxu0 %v1192
        %1213 = vmatprep.subr.bf16.mxu0 0
        %1214 = vmatpush2.bf16.xpose.msra.mxu0 0
        %1215 = vmatprep.subr.bf16.mxu0 0
        %1216 = vmatpush2.bf16.xpose.msra.mxu0 0
        %1217 = vmatprep.subr.bf16.mxu0 0
        %1218 = vmatpush2.bf16.xpose.msra.mxu0 0
        %1219 = vmatprep.subr.bf16.mxu0 0
        %1220 = vmatpush2.bf16.xpose.msra.mxu0 0
        %1221 = vmatprep.subr.bf16.mxu0 0
        %1222 = vmatpush2.bf16.xpose.msra.mxu0 0
        %1223 = vmatprep.subr.bf16.mxu0 0
        %1224 = vmatpush2.bf16.xpose.msra.mxu0 0
        %1225 = vmatprep.subr.bf16.mxu0 0
        %1226 = vmatpush2.bf16.xpose.msra.mxu0 0
        %1227 = vmatprep.subr.bf16.mxu0 0
        %1228 = vmatpush2.bf16.xpose.msra.mxu0 0
        %1229 = vmatprep.mubr.bf16.mxu0 0
        %1230 = vmatmul.mubr.bf16.gmra.mxu0 %v1189
        %v1231 = vpop.f32.mrf.mxu0
        %v1232 = vadd.f32 %v1183, %v1231
        %v1233 = vpop.f32.mrf.mxu0
        %v1234 = vpop.f32.mrf.mxu0
        %v1235 = vpop.f32.mrf.mxu0
        %1236 = vdwg.mxu0
        %v1237 = vadd.f32 %v1232, %v858
        %v1238 = vsel %vm269, %v1237, 0.0
        %1239 = vadd.xlane.f32.xlu0 %v1238
        %v1240 = vpop.xlane.xlu0 %1239
        %v1241 = vmul.f32 %v1240, %v273
        %v1242 = vsub.f32 %v1237, %v1241
        %v1243 = vmul.f32 %v1242, %v1242
        %v1244 = vsel %vm269, %v1243, 0.0
        %1245 = vadd.xlane.f32.xlu0 %v1244
        %v1246 = vpop.xlane.xlu0 %1245
        %v1247 = vmul.f32 %v1246, %v273
        %v1248 = vadd.f32 %v1247, 1e-05
        %v1249 = vrsqrt.pop %v1248
        %v1250 = vmul.f32 %v1242, %v1249
        %v1251 = vlaneseq
        %v1252 = vshrl.u32 %v1251, 7
        %v1253 = vsub.s32 2, %v1252
        %v1254 = vrot.slane %v873, %v1253
        %v1255 = vmul.f32 %v1250, %v1254
        %v1256 = vlaneseq
        %v1257 = vshrl.u32 %v1256, 7
        %v1258 = vsub.s32 3, %v1257
        %v1259 = vrot.slane %v873, %v1258
        %v1260 = vadd.f32 %v1255, %v1259
        %v1261 = vpack.c.bf16 %v1260, %v1260
        %v1262 = vlaneseq
        %v1263 = vshrl.u32 %v1262, 7
        %v1264 = vsub.s32 4, %v1263
        %v1265 = vrot.slane %v873, %v1264
        %1266 = vrot.lane.b32.xlu0 %v903, 64
        %v1267 = vpop.permute.xlu0 %1266
        %1268 = vrot.lane.b32.xlu0 %v904, 64
        %v1269 = vpop.permute.xlu0 %1268
        %1270 = vrot.lane.b32.xlu0 %v905, 64
        %v1271 = vpop.permute.xlu0 %1270
        %1272 = vrot.lane.b32.xlu0 %v906, 64
        %v1273 = vpop.permute.xlu0 %1272
        %v1275 = vsel %vm269, %v1261, 0
        %v1278 = vsel %vm269, %v1267, 0
        %v1281 = vsel %vm269, %v1269, 0
        %v1284 = vsel %vm269, %v1271, 0
        %v1287 = vsel %vm269, %v1273, 0
        %1289 = vmatprep.subr.bf16.mxu0 0
        %1290 = vmatpush1.bf16.xpose.msra.mxu0 0
        %1291 = vmatprep.subr.bf16.mxu0 0
        %1292 = vmatpush1.bf16.xpose.msra.mxu0 0
        %1293 = vmatprep.subr.bf16.mxu0 0
        %1294 = vmatpush1.bf16.xpose.msra.mxu0 0
        %1295 = vmatprep.subr.bf16.mxu0 0
        %1296 = vmatpush1.bf16.xpose.msra.mxu0 0
        %1297 = vmatprep.subr.bf16.mxu0 0
        %1298 = vmatpush1.bf16.xpose.msra.mxu0 %v1287
        %1299 = vmatprep.subr.bf16.mxu0 0
        %1300 = vmatpush1.bf16.xpose.msra.mxu0 %v1284
        %1301 = vmatprep.subr.bf16.mxu0 0
        %1302 = vmatpush1.bf16.xpose.msra.mxu0 %v1281
        %1303 = vmatprep.subr.bf16.mxu0 0
        %1304 = vmatpush1.bf16.xpose.msra.mxu0 %v1278
        %1305 = vmatprep.subr.bf16.mxu0 0
        %1306 = vmatpush2.bf16.xpose.msra.mxu0 0
        %1307 = vmatprep.subr.bf16.mxu0 0
        %1308 = vmatpush2.bf16.xpose.msra.mxu0 0
        %1309 = vmatprep.subr.bf16.mxu0 0
        %1310 = vmatpush2.bf16.xpose.msra.mxu0 0
        %1311 = vmatprep.subr.bf16.mxu0 0
        %1312 = vmatpush2.bf16.xpose.msra.mxu0 0
        %1313 = vmatprep.subr.bf16.mxu0 0
        %1314 = vmatpush2.bf16.xpose.msra.mxu0 0
        %1315 = vmatprep.subr.bf16.mxu0 0
        %1316 = vmatpush2.bf16.xpose.msra.mxu0 0
        %1317 = vmatprep.subr.bf16.mxu0 0
        %1318 = vmatpush2.bf16.xpose.msra.mxu0 0
        %1319 = vmatprep.subr.bf16.mxu0 0
        %1320 = vmatpush2.bf16.xpose.msra.mxu0 0
        %1321 = vmatprep.mubr.bf16.mxu0 0
        %1322 = vmatmul.mubr.bf16.gmra.mxu0 %v1275
        %v1323 = vpop.f32.mrf.mxu0
        %v1324 = vadd.f32 %v1265, %v1323
        %v1325 = vpop.f32.mrf.mxu0
        %v1326 = vpop.f32.mrf.mxu0
        %v1327 = vpop.f32.mrf.mxu0
        %1328 = vdwg.mxu0
        %v1329 = vmul.f32 %v1324, 0.5
        %v1330 = vmul.f32 %v1324, 0.70710677
        %v1331 = verf.f32.pop %v1330
        %v1332 = vadd.f32 %v1331, 1.0
        %v1333 = vmul.f32 %v1329, %v1332
        %v1334 = vpack.c.bf16 %v1333, %v1333
        %v1335 = vlaneseq
        %v1336 = vshrl.u32 %v1335, 7
        %v1337 = vsub.s32 5, %v1336
        %v1338 = vrot.slane %v873, %v1337
        %1339 = vrot.lane.b32.xlu0 %v903, 32
        %v1340 = vpop.permute.xlu0 %1339
        %1341 = vrot.lane.b32.xlu0 %v904, 32
        %v1342 = vpop.permute.xlu0 %1341
        %1343 = vrot.lane.b32.xlu0 %v905, 32
        %v1344 = vpop.permute.xlu0 %1343
        %1345 = vrot.lane.b32.xlu0 %v906, 32
        %v1346 = vpop.permute.xlu0 %1345
        %v1352 = vsel %vm791, %v1334, 0
        %1354 = vmatprep.subr.bf16.mxu0 0
        %1355 = vmatpush1.bf16.msra.mxu0 0
        %1356 = vmatprep.subr.bf16.mxu0 0
        %1357 = vmatpush1.bf16.msra.mxu0 0
        %1358 = vmatprep.subr.bf16.mxu0 0
        %1359 = vmatpush1.bf16.msra.mxu0 0
        %1360 = vmatprep.subr.bf16.mxu0 0
        %1361 = vmatpush1.bf16.msra.mxu0 0
        %1362 = vmatprep.subr.bf16.mxu0 0
        %1363 = vmatpush1.bf16.msra.mxu0 %v1346
        %1364 = vmatprep.subr.bf16.mxu0 0
        %1365 = vmatpush1.bf16.msra.mxu0 %v1344
        %1366 = vmatprep.subr.bf16.mxu0 0
        %1367 = vmatpush1.bf16.msra.mxu0 %v1342
        %1368 = vmatprep.subr.bf16.mxu0 0
        %1369 = vmatpush1.bf16.msra.mxu0 %v1340
        %1370 = vmatprep.subr.bf16.mxu0 0
        %1371 = vmatpush2.bf16.msra.mxu0 0
        %1372 = vmatprep.subr.bf16.mxu0 0
        %1373 = vmatpush2.bf16.msra.mxu0 0
        %1374 = vmatprep.subr.bf16.mxu0 0
        %1375 = vmatpush2.bf16.msra.mxu0 0
        %1376 = vmatprep.subr.bf16.mxu0 0
        %1377 = vmatpush2.bf16.msra.mxu0 0
        %1378 = vmatprep.subr.bf16.mxu0 0
        %1379 = vmatpush2.bf16.msra.mxu0 0
        %1380 = vmatprep.subr.bf16.mxu0 0
        %1381 = vmatpush2.bf16.msra.mxu0 0
        %1382 = vmatprep.subr.bf16.mxu0 0
        %1383 = vmatpush2.bf16.msra.mxu0 0
        %1384 = vmatprep.subr.bf16.mxu0 0
        %1385 = vmatpush2.bf16.msra.mxu0 0
        %1386 = vmatprep.mubr.bf16.mxu0 0
        %1387 = vmatmul.mubr.bf16.gmra.mxu0 %v1352
        %v1388 = vpop.f32.mrf.mxu0
        %v1389 = vadd.f32 %v1338, %v1388
        %v1390 = vpop.f32.mrf.mxu0
        %v1391 = vpop.f32.mrf.mxu0
        %v1392 = vpop.f32.mrf.mxu0
        %1393 = vdwg.mxu0
        %v1394 = vadd.f32 %v1389, %v1260
        %v1395 = vsel %vm269, %v1394, 0.0
        %1396 = vadd.xlane.f32.xlu0 %v1395
        %v1397 = vpop.xlane.xlu0 %1396
        %v1398 = vmul.f32 %v1397, %v273
        %v1399 = vsub.f32 %v1394, %v1398
        %v1400 = vmul.f32 %v1399, %v1399
        %v1401 = vsel %vm269, %v1400, 0.0
        %1402 = vadd.xlane.f32.xlu0 %v1401
        %v1403 = vpop.xlane.xlu0 %1402
        %v1404 = vmul.f32 %v1403, %v273
        %v1405 = vadd.f32 %v1404, 1e-05
        %v1406 = vrsqrt.pop %v1405
        %v1407 = vmul.f32 %v1399, %v1406
        %v1408 = vlaneseq
        %v1409 = vshrl.u32 %v1408, 7
        %v1410 = vsub.s32 6, %v1409
        %v1411 = vrot.slane %v873, %v1410
        %v1412 = vmul.f32 %v1407, %v1411
        %v1413 = vlaneseq
        %v1414 = vshrl.u32 %v1413, 7
        %v1415 = vsub.s32 7, %v1414
        %v1416 = vrot.slane %v873, %v1415
        %v1417 = vadd.f32 %v1412, %v1416
        %v1418 = vld [vmem:[%s5] sm:$0xf]
        %v1419 = vld [vmem:[%s5 + $0x4] sm:$0xf]
        %v1420 = vld [vmem:[%s5 + $0x8] sm:$0xf]
        %v1421 = vld [vmem:[%s5 + $0xc] sm:$0xf]
        %v1422 = vld [vmem:[%s5] sm:$0xf]
        %v1423 = vld [vmem:[%s5 + $0x4] sm:$0xf]
        %v1424 = vld [vmem:[%s5 + $0x8] sm:$0xf]
        %v1425 = vld [vmem:[%s5 + $0xc] sm:$0xf]
        %v1426 = vld [vmem:[%s5 + $0x10] sm:$0xf]
        %v1427 = vld [vmem:[%s5 + $0x14] sm:$0xf]
        %v1428 = vld [vmem:[%s5 + $0x18] sm:$0xf]
        %v1429 = vld [vmem:[%s5 + $0x1c] sm:$0xf]
        %v1430 = vld [vmem:[%s5 + $0x20] sm:$0xf]
        %v1431 = vld [vmem:[%s5 + $0x24] sm:$0xf]
        %v1432 = vld [vmem:[%s5 + $0x28] sm:$0xf]
        %v1433 = vld [vmem:[%s5 + $0x2c] sm:$0xf]
        %v1434 = vld [vmem:[%s5 + $0x30] sm:$0xf]
        %v1435 = vld [vmem:[%s5 + $0x34] sm:$0xf]
        %v1436 = vld [vmem:[%s5 + $0x38] sm:$0xf]
        %v1437 = vld [vmem:[%s5 + $0x3c] sm:$0xf]
        %v1438 = vpack.c.bf16 %v1417, %v1417
        %v1443 = vunpack.c.l.b16 %v1418
        %v1444 = vunpack.c.l.b16 %v1419
        %v1445 = vunpack.c.l.b16 %v1420
        %v1446 = vunpack.c.l.b16 %v1421
        %v1447 = vpack.c.b16 %v1444, %v1443
        %v1448 = vpack.c.b16 %v1446, %v1445
        %1449 = vrot.lane.b32.xlu0 %v1447, 96
        %v1450 = vpop.permute.xlu0 %1449
        %1451 = vrot.lane.b32.xlu0 %v1448, 96
        %v1452 = vpop.permute.xlu0 %1451
        %v1454 = vrot.slane %v267, 2
        %v1457 = vsel %vm269, %v1438, 0
        %v1460 = vsel %vm269, %v1450, 0
        %v1463 = vsel %vm269, %v1452, 0
        %1465 = vmatprep.subr.bf16.mxu0 0
        %1466 = vmatpush1.bf16.xpose.msra.mxu0 0
        %1467 = vmatprep.subr.bf16.mxu0 0
        %1468 = vmatpush1.bf16.xpose.msra.mxu0 0
        %1469 = vmatprep.subr.bf16.mxu0 0
        %1470 = vmatpush1.bf16.xpose.msra.mxu0 0
        %1471 = vmatprep.subr.bf16.mxu0 0
        %1472 = vmatpush1.bf16.xpose.msra.mxu0 0
        %1473 = vmatprep.subr.bf16.mxu0 0
        %1474 = vmatpush1.bf16.xpose.msra.mxu0 0
        %1475 = vmatprep.subr.bf16.mxu0 0
        %1476 = vmatpush1.bf16.xpose.msra.mxu0 0
        %1477 = vmatprep.subr.bf16.mxu0 0
        %1478 = vmatpush1.bf16.xpose.msra.mxu0 %v1463
        %1479 = vmatprep.subr.bf16.mxu0 0
        %1480 = vmatpush1.bf16.xpose.msra.mxu0 %v1460
        %1481 = vmatprep.subr.bf16.mxu0 0
        %1482 = vmatpush2.bf16.xpose.msra.mxu0 0
        %1483 = vmatprep.subr.bf16.mxu0 0
        %1484 = vmatpush2.bf16.xpose.msra.mxu0 0
        %1485 = vmatprep.subr.bf16.mxu0 0
        %1486 = vmatpush2.bf16.xpose.msra.mxu0 0
        %1487 = vmatprep.subr.bf16.mxu0 0
        %1488 = vmatpush2.bf16.xpose.msra.mxu0 0
        %1489 = vmatprep.subr.bf16.mxu0 0
        %1490 = vmatpush2.bf16.xpose.msra.mxu0 0
        %1491 = vmatprep.subr.bf16.mxu0 0
        %1492 = vmatpush2.bf16.xpose.msra.mxu0 0
        %1493 = vmatprep.subr.bf16.mxu0 0
        %1494 = vmatpush2.bf16.xpose.msra.mxu0 0
        %1495 = vmatprep.subr.bf16.mxu0 0
        %1496 = vmatpush2.bf16.xpose.msra.mxu0 0
        %1497 = vmatprep.mubr.bf16.mxu0 0
        %1498 = vmatmul.mubr.bf16.gmra.mxu0 %v1457
        %v1499 = vpop.f32.mrf.mxu0
        %v1500 = vadd.f32 %v1454, %v1499
        %v1501 = vpop.f32.mrf.mxu0
        %v1502 = vpop.f32.mrf.mxu0
        %v1503 = vpop.f32.mrf.mxu0
        %1504 = vdwg.mxu0
        %v1505 = vtanh.pop %v1500
        %v1506 = vpack.c.bf16 %v1505, %v1505
        %v1523 = vunpack.c.l.b16 %v1422
        %v1524 = vunpack.c.l.b16 %v1423
        %v1525 = vunpack.c.l.b16 %v1424
        %v1526 = vunpack.c.l.b16 %v1425
        %v1527 = vunpack.c.l.b16 %v1426
        %v1528 = vunpack.c.l.b16 %v1427
        %v1529 = vunpack.c.l.b16 %v1428
        %v1530 = vunpack.c.l.b16 %v1429
        %v1531 = vunpack.c.l.b16 %v1430
        %v1532 = vunpack.c.l.b16 %v1431
        %v1533 = vunpack.c.l.b16 %v1432
        %v1534 = vunpack.c.l.b16 %v1433
        %v1535 = vunpack.c.l.b16 %v1434
        %v1536 = vunpack.c.l.b16 %v1435
        %v1537 = vunpack.c.l.b16 %v1436
        %v1538 = vunpack.c.l.b16 %v1437
        %v1539 = vpack.c.b16 %v1524, %v1523
        %v1540 = vpack.c.b16 %v1526, %v1525
        %v1541 = vpack.c.b16 %v1528, %v1527
        %v1542 = vpack.c.b16 %v1530, %v1529
        %v1543 = vpack.c.b16 %v1532, %v1531
        %v1544 = vpack.c.b16 %v1534, %v1533
        %v1545 = vpack.c.b16 %v1536, %v1535
        %v1546 = vpack.c.b16 %v1538, %v1537
        %v1547 = vrot.slane %v267, 3
        %v1550 = vsel %vm269, %v1506, 0
        %v1553 = vsel %vm269, %v1539, 0
        %v1556 = vsel %vm269, %v1540, 0
        %v1559 = vsel %vm269, %v1541, 0
        %v1562 = vsel %vm269, %v1542, 0
        %v1565 = vsel %vm269, %v1543, 0
        %v1568 = vsel %vm269, %v1544, 0
        %v1571 = vsel %vm269, %v1545, 0
        %v1574 = vsel %vm269, %v1546, 0
        %1576 = vmatprep.subr.bf16.mxu0 0
        %1577 = vmatpush1.bf16.xpose.msra.mxu0 %v1574
        %1578 = vmatprep.subr.bf16.mxu0 0
        %1579 = vmatpush1.bf16.xpose.msra.mxu0 %v1571
        %1580 = vmatprep.subr.bf16.mxu0 0
        %1581 = vmatpush1.bf16.xpose.msra.mxu0 %v1568
        %1582 = vmatprep.subr.bf16.mxu0 0
        %1583 = vmatpush1.bf16.xpose.msra.mxu0 %v1565
        %1584 = vmatprep.subr.bf16.mxu0 0
        %1585 = vmatpush1.bf16.xpose.msra.mxu0 %v1562
        %1586 = vmatprep.subr.bf16.mxu0 0
        %1587 = vmatpush1.bf16.xpose.msra.mxu0 %v1559
        %1588 = vmatprep.subr.bf16.mxu0 0
        %1589 = vmatpush1.bf16.xpose.msra.mxu0 %v1556
        %1590 = vmatprep.subr.bf16.mxu0 0
        %1591 = vmatpush1.bf16.xpose.msra.mxu0 %v1553
        %1592 = vmatprep.subr.bf16.mxu0 0
        %1593 = vmatpush2.bf16.xpose.msra.mxu0 0
        %1594 = vmatprep.subr.bf16.mxu0 0
        %1595 = vmatpush2.bf16.xpose.msra.mxu0 0
        %1596 = vmatprep.subr.bf16.mxu0 0
        %1597 = vmatpush2.bf16.xpose.msra.mxu0 0
        %1598 = vmatprep.subr.bf16.mxu0 0
        %1599 = vmatpush2.bf16.xpose.msra.mxu0 0
        %1600 = vmatprep.subr.bf16.mxu0 0
        %1601 = vmatpush2.bf16.xpose.msra.mxu0 0
        %1602 = vmatprep.subr.bf16.mxu0 0
        %1603 = vmatpush2.bf16.xpose.msra.mxu0 0
        %1604 = vmatprep.subr.bf16.mxu0 0
        %1605 = vmatpush2.bf16.xpose.msra.mxu0 0
        %1606 = vmatprep.subr.bf16.mxu0 0
        %1607 = vmatpush2.bf16.xpose.msra.mxu0 0
        %1608 = vmatprep.mubr.bf16.mxu0 0
        %1609 = vmatmul.mubr.bf16.gmra.mxu0 %v1550
        %v1610 = vpop.f32.mrf.mxu0
        %v1611 = vadd.f32 %v1547, %v1610
        %v1612 = vpop.f32.mrf.mxu0
        %v1613 = vpop.f32.mrf.mxu0
        %v1614 = vpop.f32.mrf.mxu0
        %1615 = vdwg.mxu0
        %1616 = vst [vmem:[%s256] sm:$0x1] %v1611
        %s1617 = sand.u32 %s164, 1
        %s1618 = scalar_lea.sflag [#allocation3], %s1617
        %s1619 = sand.u32 %s164, 1
        %s1620 = scalar_lea.vmem [#allocation2], %s1619
        // Predicated region
        $region45: #{transformer_multi_classifier.1} parent=43 // pred_check
          %p1621 = pneg %p174
        $region46: #{transformer_multi_classifier.1} parent=43 // pred_check_branch
          %1623 = sbr.rel (%p1621) target = $region48
        $region47: #{transformer_multi_classifier.1} parent=43 // pred_region
          %s1625 = ssub.s32 16, 16
          %1626 = vsyncadd %s1618, %s1625
          %s1627 = smul.addr %s20, 16
          %s1628 = scalar_lea.hbm %s6, %s1627
          %s1630 = sshll.u32 %s1620, 4
          %s1631 = int_to_ptr.vmem [resolvable:$true] %s1630
          %1633 = dma.vmem_to_hbm [thread:$0]  %s1631, 16, %s1628, %s1618
        $region48: #{transformer_multi_classifier.1} parent=43 // pred_fallthru
          _
      $region44: #{transformer_multi_classifier.1} parent=5 // pred_fallthru
        _
      %p1634 = scmp.le.s32.totalorder 2, %s15
      // Predicated region
      $region49: #{transformer_multi_classifier.1} parent=5 // pred_check
        %p1635 = pneg %p1634
      $region50: #{transformer_multi_classifier.1} parent=5 // pred_check_branch
        %1637 = sbr.rel (%p1635) target = $region52
      $region51: #{transformer_multi_classifier.1} parent=5 // pred_region
        %s1638 = ssub.s32 %s15, 2
        // Predicated region
        $region53: #{transformer_multi_classifier.1} parent=51 // pred_check
          %p1639 = pneg %p180
        $region54: #{transformer_multi_classifier.1} parent=51 // pred_check_branch
          %1641 = sbr.rel (%p1639) target = $region56
        $region55: #{transformer_multi_classifier.1} parent=51 // pred_region
          %s1642 = sand.u32 %s165, 1
          %s1643 = scalar_lea.sflag [#allocation3], %s1642
          %s1644 = sand.u32 %s165, 1
          %s1645 = scalar_lea.vmem [#allocation2], %s1644
          %1646 = dma.done %s1643, 16
        $region56: #{transformer_multi_classifier.1} parent=51 // pred_fallthru
          _
      $region52: #{transformer_multi_classifier.1} parent=5 // pred_fallthru
        _
    $region6: #{transformer_multi_classifier.1} parent=1 // loop_footer
      %s19 = sadd.s32 1, %s15
    $region7: #{transformer_multi_classifier.1} parent=1 // loop_footer_branch
      %14 = sbr.rel target = $region3
    $region8: #{transformer_multi_classifier.1} parent=1 // loop_exit
      _
    %1647 = vsyncpa [#allocation3], 1
    %s1648 = scalar_lea.sflag [#allocation3], 1
    %1649 = vsyncpa %s1648, 1

</llo_original>
